<compile_context>
chip_gen: v5e
topology: v5e:2x2
jax: 0.10.0
libtpu: 0.0.40
codegen_flags: <defaults>
</compile_context>

<pallas_src>
import numpy as np

import jax
import jax.numpy as jnp
from jax.experimental import pallas as pl
from jax.experimental.pallas import tpu as pltpu

K = 7            # pooling window (AvgPool2d(7, 1))
PAD = K // 2     # ReflectionPad2d(3)
C1 = 0.01 ** 2
C2 = 0.03 ** 2


def _reflect_box_matrix(n: int) -> np.ndarray:
    """(n, n) matrix A with A[i, r] = #times source index r enters the 7-tap
    window centered at output i of a ReflectionPad(3)-padded length-n axis."""
    if n < PAD + 1:
        raise ValueError(f"axis length {n} too small for reflection pad {PAD}")
    a = np.zeros((n, n), dtype=np.float32)
    for i in range(n):
        for t in range(-PAD, PAD + 1):
            m = i + t
            if m < 0:
                m = -m
            elif m > n - 1:
                m = 2 * (n - 1) - m
            a[i, m] += 1.0
    return a


def _pick_block_planes(B: int, H: int, W: int) -> int:
    """Planes per grid step: big enough to amortize per-step overhead, small
    enough to fit VMEM, and (if possible) leaving a parallel grid >= 2."""
    per_plane = 32 * H * W * 4           # conservative live f32 bytes per plane
    budget = 8 * 1024 * 1024
    max_tb = max(1, min(8, budget // per_plane, B))
    for tb in range(max_tb, 0, -1):
        if B % tb == 0 and B // tb >= 2:
            return tb
    return max_tb if B % max_tb == 0 else 1


def _ssim_photo_kernel(ah_bd_ref, awt_ref, x_ref, y_ref, ssim_ref, photo_ref):
    # ah_bd_ref: (TB*H, TB*H) block-diag reflected 7-tap box-sum matrix along H
    # awt_ref:   (W, W)       transposed reflected 7-tap box-sum matrix along W
    # x_ref/y_ref:        (TB, H, W) image planes (tgt, ref_warped)
    # ssim_ref/photo_ref: (TB, H, W) outputs
    tb, h, w = x_ref.shape
    n = tb * h

    x = x_ref[...].astype(jnp.float32)
    y = y_ref[...].astype(jnp.float32)

    ah_bd = ah_bd_ref[...]
    awt = awt_ref[...]
    inv = jnp.float32(1.0 / (K * K))

    def box(z):
        # Separable reflected 7x7 box sum over the whole block on the MXU:
        #   rows:   (TB*H, W) @ A_w^T       (one lane-dense matmul)
        #   cols:   kron(I, A_h) @ result   (one block-diag matmul)
        zw = jnp.dot(z.reshape(n, w), awt, preferred_element_type=jnp.float32)
        zhw = jnp.dot(ah_bd, zw, preferred_element_type=jnp.float32)
        return zhw.reshape(tb, h, w)

    mu_x = box(x) * inv
    mu_y = box(y) * inv
    e_xx = box(x * x) * inv
    e_yy = box(y * y) * inv
    e_xy = box(x * y) * inv

    sigma_x = e_xx - mu_x * mu_x
    sigma_y = e_yy - mu_y * mu_y
    sigma_xy = e_xy - mu_x * mu_y

    ssim_n = (2.0 * mu_x * mu_y + C1) * (2.0 * sigma_xy + C2)
    ssim_d = (mu_x * mu_x + mu_y * mu_y + C1) * (sigma_x + sigma_y + C2)
    ssim_map = jnp.clip((1.0 - ssim_n / ssim_d) * 0.5, 0.0, 1.0)

    # Fused photometric term of pairwise_photo_and_geometry_loss.
    l1 = jnp.clip(jnp.abs(x - y), 0.0, 1.0)
    photo = 0.15 * l1 + 0.85 * ssim_map

    ssim_ref[...] = ssim_map.astype(ssim_ref.dtype)
    photo_ref[...] = photo.astype(photo_ref.dtype)


def ssim_and_photometric(tgt_img, ref_img_warped):
    """SSIM loss map and fused 0.15*L1 + 0.85*SSIM map.

    tgt_img, ref_img_warped: (N, C, H, W).  Returns two (N, C, H, W) arrays.
    """
    N, C, H, W = tgt_img.shape
    B = N * C
    x = tgt_img.reshape(B, H, W)
    y = ref_img_warped.reshape(B, H, W)

    tb = _pick_block_planes(B, H, W)
    grid = (B // tb,)

    a_h = _reflect_box_matrix(H)                                   # (H, H)
    ah_bd = jnp.asarray(np.kron(np.eye(tb, dtype=np.float32), a_h))  # (tb*H, tb*H)
    awt = jnp.asarray(_reflect_box_matrix(W).T)                    # (W, W)

    img_spec = pl.BlockSpec((tb, H, W), lambda b: (b, 0, 0))
    bd_spec = pl.BlockSpec((tb * H, tb * H), lambda b: (0, 0))
    awt_spec = pl.BlockSpec((W, W), lambda b: (0, 0))

    ssim_map, photo_map = pl.pallas_call(
        _ssim_photo_kernel,
        out_shape=(
            jax.ShapeDtypeStruct((B, H, W), tgt_img.dtype),
            jax.ShapeDtypeStruct((B, H, W), tgt_img.dtype),
        ),
        grid_spec=pltpu.PrefetchScalarGridSpec(
            num_scalar_prefetch=0,
            grid=grid,
            in_specs=[bd_spec, awt_spec, img_spec, img_spec],
            out_specs=(img_spec, img_spec),
        ),
        compiler_params=pltpu.CompilerParams(
            dimension_semantics=("parallel",),
            vmem_limit_bytes=48 * 1024 * 1024,
        ),
    )(ah_bd, awt, x, y)

    return (ssim_map.reshape(N, C, H, W), photo_map.reshape(N, C, H, W))


def ssim(x, y):
    """Matches the PyTorch SSIM module's forward: SSIM loss map only."""
    return ssim_and_photometric(x, y)[0]


def _reference_ssim_photo(tgt, ref):
    """Pure-JAX reference (ReflectionPad2d(3) + AvgPool2d(7,1))."""
    x = tgt.astype(jnp.float32)
    y = ref.astype(jnp.float32)

    def pool(z):
        zp = jnp.pad(z, ((0, 0), (0, 0), (PAD, PAD), (PAD, PAD)), mode="reflect")
        s = jax.lax.reduce_window(zp, 0.0, jax.lax.add,
                                  (1, 1, K, K), (1, 1, 1, 1), "VALID")
        return s / (K * K)

    mu_x, mu_y = pool(x), pool(y)
    sigma_x = pool(x * x) - mu_x * mu_x
    sigma_y = pool(y * y) - mu_y * mu_y
    sigma_xy = pool(x * y) - mu_x * mu_y
    n = (2.0 * mu_x * mu_y + C1) * (2.0 * sigma_xy + C2)
    d = (mu_x * mu_x + mu_y * mu_y + C1) * (sigma_x + sigma_y + C2)
    ssim_map = jnp.clip((1.0 - n / d) * 0.5, 0.0, 1.0)
    photo = 0.15 * jnp.clip(jnp.abs(x - y), 0.0, 1.0) + 0.85 * ssim_map
    return ssim_map, photo


if __name__ == "__main__":
    key = jax.random.PRNGKey(0)
    kx, ky = jax.random.split(key)
    # Small image-like shapes; W=128 keeps the output lane-dense on TPU.
    N, C, H, W = 2, 4, 16, 128
    tgt = jax.random.uniform(kx, (N, C, H, W), dtype=jnp.float32)
    ref_warped = jax.random.uniform(ky, (N, C, H, W), dtype=jnp.float32)

    ssim_map, photo_map = jax.jit(ssim_and_photometric)(tgt, ref_warped)
    jax.block_until_ready((ssim_map, photo_map))

    assert ssim_map.shape == (N, C, H, W)
    assert photo_map.shape == (N, C, H, W)
    assert bool(jnp.all(jnp.isfinite(ssim_map)))
    assert bool(jnp.all(jnp.isfinite(photo_map)))

    # Correctness against a pure-JAX reference of the PyTorch forward.
    ref_s, ref_p = _reference_ssim_photo(tgt, ref_warped)
    err_s = float(jnp.max(jnp.abs(ssim_map.astype(jnp.float32) - ref_s)))
    err_p = float(jnp.max(jnp.abs(photo_map.astype(jnp.float32) - ref_p)))
    assert err_s < 5e-3 and err_p < 5e-3, (err_s, err_p)

    print("KERNEL_OK")
</pallas_src>

<mosaic_0001>
module attributes {stable_mosaic.version = 11 : i64} {
  func.func @_ssim_photo_kernel(%arg0: i32, %arg1: memref<64x64xf32, #tpu.memory_space<vmem>>, %arg2: memref<128x128xf32, #tpu.memory_space<vmem>>, %arg3: memref<4x16x128xf32, #tpu.memory_space<vmem>>, %arg4: memref<4x16x128xf32, #tpu.memory_space<vmem>>, %arg5: memref<4x16x128xf32, #tpu.memory_space<vmem>>, %arg6: memref<4x16x128xf32, #tpu.memory_space<vmem>>) attributes {dimension_semantics = [#tpu.dimension_semantics<parallel>], iteration_bounds = array<i64: 2>, scalar_prefetch = 0 : i64, scratch_operands = 0 : i64, tpu.core_type = #tpu.core_type<tc>, window_params = [{pipeline_mode = #tpu.pipeline_mode<synchronous>, transform_indices = @transform_0, window_bounds = array<i64: 64, 64>}, {pipeline_mode = #tpu.pipeline_mode<synchronous>, transform_indices = @transform_1, window_bounds = array<i64: 128, 128>}, {transform_indices = @transform_2, window_bounds = array<i64: 4, 16, 128>}, {transform_indices = @transform_3, window_bounds = array<i64: 4, 16, 128>}, {transform_indices = @transform_4, window_bounds = array<i64: 4, 16, 128>}, {transform_indices = @transform_5, window_bounds = array<i64: 4, 16, 128>}]} {
    %c0 = arith.constant 0 : index
    %c0_0 = arith.constant 0 : index
    %c0_1 = arith.constant 0 : index
    %0 = vector.load %arg3[%c0, %c0_0, %c0_1] : memref<4x16x128xf32, #tpu.memory_space<vmem>>, vector<4x16x128xf32>
    %c0_2 = arith.constant 0 : index
    %c0_3 = arith.constant 0 : index
    %c0_4 = arith.constant 0 : index
    %1 = vector.load %arg4[%c0_2, %c0_3, %c0_4] : memref<4x16x128xf32, #tpu.memory_space<vmem>>, vector<4x16x128xf32>
    %c0_5 = arith.constant 0 : index
    %c0_6 = arith.constant 0 : index
    %2 = vector.load %arg1[%c0_5, %c0_6] : memref<64x64xf32, #tpu.memory_space<vmem>>, vector<64x64xf32>
    %c0_7 = arith.constant 0 : index
    %c0_8 = arith.constant 0 : index
    %3 = vector.load %arg2[%c0_7, %c0_8] : memref<128x128xf32, #tpu.memory_space<vmem>>, vector<128x128xf32>
    %4 = vector.shape_cast %0 : vector<4x16x128xf32> to vector<64x128xf32>
    %cst = arith.constant dense<0.000000e+00> : vector<64x128xf32>
    %5 = tpu.matmul %4, %3, %cst {dimension_numbers = #tpu.dot_dimension_numbers<[1], [0], [0], [1], [0, 0, 1, 1], [], []>} : vector<64x128xf32>, vector<128x128xf32>, vector<64x128xf32> -> vector<64x128xf32>
    %cst_9 = arith.constant dense<0.000000e+00> : vector<64x128xf32>
    %6 = tpu.matmul %2, %5, %cst_9 {dimension_numbers = #tpu.dot_dimension_numbers<[1], [0], [0], [1], [0, 0, 1, 1], [], []>} : vector<64x64xf32>, vector<64x128xf32>, vector<64x128xf32> -> vector<64x128xf32>
    %7 = vector.shape_cast %6 : vector<64x128xf32> to vector<4x16x128xf32>
    %cst_10 = arith.constant 0.0204081628 : f32
    %8 = vector.broadcast %cst_10 : f32 to vector<4x16x128xf32>
    %9 = arith.mulf %7, %8 : vector<4x16x128xf32>
    %10 = vector.shape_cast %1 : vector<4x16x128xf32> to vector<64x128xf32>
    %cst_11 = arith.constant dense<0.000000e+00> : vector<64x128xf32>
    %11 = tpu.matmul %10, %3, %cst_11 {dimension_numbers = #tpu.dot_dimension_numbers<[1], [0], [0], [1], [0, 0, 1, 1], [], []>} : vector<64x128xf32>, vector<128x128xf32>, vector<64x128xf32> -> vector<64x128xf32>
    %cst_12 = arith.constant dense<0.000000e+00> : vector<64x128xf32>
    %12 = tpu.matmul %2, %11, %cst_12 {dimension_numbers = #tpu.dot_dimension_numbers<[1], [0], [0], [1], [0, 0, 1, 1], [], []>} : vector<64x64xf32>, vector<64x128xf32>, vector<64x128xf32> -> vector<64x128xf32>
    %13 = vector.shape_cast %12 : vector<64x128xf32> to vector<4x16x128xf32>
    %cst_13 = arith.constant 0.0204081628 : f32
    %14 = vector.broadcast %cst_13 : f32 to vector<4x16x128xf32>
    %15 = arith.mulf %13, %14 : vector<4x16x128xf32>
    %16 = arith.mulf %0, %0 : vector<4x16x128xf32>
    %17 = vector.shape_cast %16 : vector<4x16x128xf32> to vector<64x128xf32>
    %cst_14 = arith.constant dense<0.000000e+00> : vector<64x128xf32>
    %18 = tpu.matmul %17, %3, %cst_14 {dimension_numbers = #tpu.dot_dimension_numbers<[1], [0], [0], [1], [0, 0, 1, 1], [], []>} : vector<64x128xf32>, vector<128x128xf32>, vector<64x128xf32> -> vector<64x128xf32>
    %cst_15 = arith.constant dense<0.000000e+00> : vector<64x128xf32>
    %19 = tpu.matmul %2, %18, %cst_15 {dimension_numbers = #tpu.dot_dimension_numbers<[1], [0], [0], [1], [0, 0, 1, 1], [], []>} : vector<64x64xf32>, vector<64x128xf32>, vector<64x128xf32> -> vector<64x128xf32>
    %20 = vector.shape_cast %19 : vector<64x128xf32> to vector<4x16x128xf32>
    %cst_16 = arith.constant 0.0204081628 : f32
    %21 = vector.broadcast %cst_16 : f32 to vector<4x16x128xf32>
    %22 = arith.mulf %20, %21 : vector<4x16x128xf32>
    %23 = arith.mulf %1, %1 : vector<4x16x128xf32>
    %24 = vector.shape_cast %23 : vector<4x16x128xf32> to vector<64x128xf32>
    %cst_17 = arith.constant dense<0.000000e+00> : vector<64x128xf32>
    %25 = tpu.matmul %24, %3, %cst_17 {dimension_numbers = #tpu.dot_dimension_numbers<[1], [0], [0], [1], [0, 0, 1, 1], [], []>} : vector<64x128xf32>, vector<128x128xf32>, vector<64x128xf32> -> vector<64x128xf32>
    %cst_18 = arith.constant dense<0.000000e+00> : vector<64x128xf32>
    %26 = tpu.matmul %2, %25, %cst_18 {dimension_numbers = #tpu.dot_dimension_numbers<[1], [0], [0], [1], [0, 0, 1, 1], [], []>} : vector<64x64xf32>, vector<64x128xf32>, vector<64x128xf32> -> vector<64x128xf32>
    %27 = vector.shape_cast %26 : vector<64x128xf32> to vector<4x16x128xf32>
    %cst_19 = arith.constant 0.0204081628 : f32
    %28 = vector.broadcast %cst_19 : f32 to vector<4x16x128xf32>
    %29 = arith.mulf %27, %28 : vector<4x16x128xf32>
    %30 = arith.mulf %0, %1 : vector<4x16x128xf32>
    %31 = vector.shape_cast %30 : vector<4x16x128xf32> to vector<64x128xf32>
    %cst_20 = arith.constant dense<0.000000e+00> : vector<64x128xf32>
    %32 = tpu.matmul %31, %3, %cst_20 {dimension_numbers = #tpu.dot_dimension_numbers<[1], [0], [0], [1], [0, 0, 1, 1], [], []>} : vector<64x128xf32>, vector<128x128xf32>, vector<64x128xf32> -> vector<64x128xf32>
    %cst_21 = arith.constant dense<0.000000e+00> : vector<64x128xf32>
    %33 = tpu.matmul %2, %32, %cst_21 {dimension_numbers = #tpu.dot_dimension_numbers<[1], [0], [0], [1], [0, 0, 1, 1], [], []>} : vector<64x64xf32>, vector<64x128xf32>, vector<64x128xf32> -> vector<64x128xf32>
    %34 = vector.shape_cast %33 : vector<64x128xf32> to vector<4x16x128xf32>
    %cst_22 = arith.constant 0.0204081628 : f32
    %35 = vector.broadcast %cst_22 : f32 to vector<4x16x128xf32>
    %36 = arith.mulf %34, %35 : vector<4x16x128xf32>
    %37 = arith.mulf %9, %9 : vector<4x16x128xf32>
    %38 = arith.subf %22, %37 : vector<4x16x128xf32>
    %39 = arith.mulf %15, %15 : vector<4x16x128xf32>
    %40 = arith.subf %29, %39 : vector<4x16x128xf32>
    %41 = arith.mulf %9, %15 : vector<4x16x128xf32>
    %42 = arith.subf %36, %41 : vector<4x16x128xf32>
    %cst_23 = arith.constant 2.000000e+00 : f32
    %43 = vector.broadcast %cst_23 : f32 to vector<4x16x128xf32>
    %44 = arith.mulf %43, %9 : vector<4x16x128xf32>
    %45 = arith.mulf %44, %15 : vector<4x16x128xf32>
    %cst_24 = arith.constant 9.99999974E-5 : f32
    %46 = vector.broadcast %cst_24 : f32 to vector<4x16x128xf32>
    %47 = arith.addf %45, %46 : vector<4x16x128xf32>
    %cst_25 = arith.constant 2.000000e+00 : f32
    %48 = vector.broadcast %cst_25 : f32 to vector<4x16x128xf32>
    %49 = arith.mulf %48, %42 : vector<4x16x128xf32>
    %cst_26 = arith.constant 8.99999984E-4 : f32
    %50 = vector.broadcast %cst_26 : f32 to vector<4x16x128xf32>
    %51 = arith.addf %49, %50 : vector<4x16x128xf32>
    %52 = arith.mulf %47, %51 : vector<4x16x128xf32>
    %53 = arith.mulf %9, %9 : vector<4x16x128xf32>
    %54 = arith.mulf %15, %15 : vector<4x16x128xf32>
    %55 = arith.addf %53, %54 : vector<4x16x128xf32>
    %cst_27 = arith.constant 9.99999974E-5 : f32
    %56 = vector.broadcast %cst_27 : f32 to vector<4x16x128xf32>
    %57 = arith.addf %55, %56 : vector<4x16x128xf32>
    %58 = arith.addf %38, %40 : vector<4x16x128xf32>
    %cst_28 = arith.constant 8.99999984E-4 : f32
    %59 = vector.broadcast %cst_28 : f32 to vector<4x16x128xf32>
    %60 = arith.addf %58, %59 : vector<4x16x128xf32>
    %61 = arith.mulf %57, %60 : vector<4x16x128xf32>
    %62 = arith.divf %52, %61 : vector<4x16x128xf32>
    %cst_29 = arith.constant 1.000000e+00 : f32
    %63 = vector.broadcast %cst_29 : f32 to vector<4x16x128xf32>
    %64 = arith.subf %63, %62 : vector<4x16x128xf32>
    %cst_30 = arith.constant 5.000000e-01 : f32
    %65 = vector.broadcast %cst_30 : f32 to vector<4x16x128xf32>
    %66 = arith.mulf %64, %65 : vector<4x16x128xf32>
    %cst_31 = arith.constant 0.000000e+00 : f32
    %cst_32 = arith.constant 1.000000e+00 : f32
    %67 = vector.broadcast %cst_31 : f32 to vector<4x16x128xf32>
    %68 = arith.maximumf %67, %66 : vector<4x16x128xf32>
    %69 = vector.broadcast %cst_32 : f32 to vector<4x16x128xf32>
    %70 = arith.minimumf %69, %68 : vector<4x16x128xf32>
    %71 = arith.subf %0, %1 : vector<4x16x128xf32>
    %72 = math.absf %71 : vector<4x16x128xf32>
    %cst_33 = arith.constant 0.000000e+00 : f32
    %cst_34 = arith.constant 1.000000e+00 : f32
    %73 = vector.broadcast %cst_33 : f32 to vector<4x16x128xf32>
    %74 = arith.maximumf %73, %72 : vector<4x16x128xf32>
    %75 = vector.broadcast %cst_34 : f32 to vector<4x16x128xf32>
    %76 = arith.minimumf %75, %74 : vector<4x16x128xf32>
    %cst_35 = arith.constant 1.500000e-01 : f32
    %77 = vector.broadcast %cst_35 : f32 to vector<4x16x128xf32>
    %78 = arith.mulf %77, %76 : vector<4x16x128xf32>
    %cst_36 = arith.constant 8.500000e-01 : f32
    %79 = vector.broadcast %cst_36 : f32 to vector<4x16x128xf32>
    %80 = arith.mulf %79, %70 : vector<4x16x128xf32>
    %81 = arith.addf %78, %80 : vector<4x16x128xf32>
    %c0_37 = arith.constant 0 : index
    %c0_38 = arith.constant 0 : index
    %c0_39 = arith.constant 0 : index
    %82 = vector.load %arg5[%c0_37, %c0_38, %c0_39] : memref<4x16x128xf32, #tpu.memory_space<vmem>>, vector<4x16x128xf32>
    tpu.vector_store %arg5[%c0_37, %c0_38, %c0_39], %70 {strides = array<i32>} : memref<4x16x128xf32, #tpu.memory_space<vmem>>, vector<4x16x128xf32>,
    %c0_40 = arith.constant 0 : index
    %c0_41 = arith.constant 0 : index
    %c0_42 = arith.constant 0 : index
    %83 = vector.load %arg6[%c0_40, %c0_41, %c0_42] : memref<4x16x128xf32, #tpu.memory_space<vmem>>, vector<4x16x128xf32>
    tpu.vector_store %arg6[%c0_40, %c0_41, %c0_42], %81 {strides = array<i32>} : memref<4x16x128xf32, #tpu.memory_space<vmem>>, vector<4x16x128xf32>,
    return
  }
  func.func @transform_0(%arg0: i32) -> (i32, i32) {
    %c0_i32 = arith.constant 0 : i32
    %c0_i32_0 = arith.constant 0 : i32
    %c0_i32_1 = arith.constant 0 : i32
    return %c0_i32, %c0_i32_0 : i32, i32
  }
  func.func @transform_1(%arg0: i32) -> (i32, i32) {
    %c0_i32 = arith.constant 0 : i32
    %c0_i32_0 = arith.constant 0 : i32
    %c0_i32_1 = arith.constant 0 : i32
    return %c0_i32, %c0_i32_0 : i32, i32
  }
  func.func @transform_2(%arg0: i32) -> (i32, i32, i32) {
    %c0_i32 = arith.constant 0 : i32
    %c0_i32_0 = arith.constant 0 : i32
    %c0_i32_1 = arith.constant 0 : i32
    return %arg0, %c0_i32, %c0_i32_0 : i32, i32, i32
  }
  func.func @transform_3(%arg0: i32) -> (i32, i32, i32) {
    %c0_i32 = arith.constant 0 : i32
    %c0_i32_0 = arith.constant 0 : i32
    %c0_i32_1 = arith.constant 0 : i32
    return %arg0, %c0_i32, %c0_i32_0 : i32, i32, i32
  }
  func.func @transform_4(%arg0: i32) -> (i32, i32, i32) {
    %c0_i32 = arith.constant 0 : i32
    %c0_i32_0 = arith.constant 0 : i32
    %c0_i32_1 = arith.constant 0 : i32
    return %arg0, %c0_i32, %c0_i32_0 : i32, i32, i32
  }
  func.func @transform_5(%arg0: i32) -> (i32, i32, i32) {
    %c0_i32 = arith.constant 0 : i32
    %c0_i32_0 = arith.constant 0 : i32
    %c0_i32_1 = arith.constant 0 : i32
    return %arg0, %c0_i32, %c0_i32_0 : i32, i32, i32
  }
}

</mosaic_0001>

<llo_original>
// kernel: ssim_and_photometric.1
$region0: #{ssim_and_photometric.1}
  #allocation0 [shape = 'u32[]', space=smem, size = 0x4, offset = 0x4, fixed_abs, tag = 'smem constant byte address 0x4 - core index']
  #allocation1 [shape = 'u32[72,128]{1,0:T(1,128)}', space=vmem, size = 0x9000, scoped, tag = 'internal scratch']
  %s0 = inlined_call_operand.hbm [shape: f32[64,64], index: 0, kind: input, shape index: {}]
  %s1 = inlined_call_operand.hbm [shape: f32[128,128], index: 1, kind: input, shape index: {}]
  %s2 = inlined_call_operand.hbm [shape: f32[8,16,128], index: 2, kind: input, shape index: {}]
  %s3 = inlined_call_operand.hbm [shape: f32[8,16,128], index: 3, kind: input, shape index: {}]
  %s4 = inlined_call_operand.hbm [shape: f32[8,16,128], index: 4, kind: output, shape index: {0}]
  %s5 = inlined_call_operand.hbm [shape: f32[8,16,128], index: 5, kind: output, shape index: {1}]
  %6 = xla_tuple %s4, %s5
  %s7 = sld [smem:[#allocation0]]
  $region73: #{ssim_and_photometric.1} parent=0
    _
  %s9 = ssub.s32 1, %s7
  %s10 = scalar_select 0, %s9, %s7
  $region1: #{ssim_and_photometric.1} parent=0
    #allocation2 [shape = 'u8[32768]{0}', space=vmem, size = 0x8000, scoped, tag = 'input window, operand 0, single buffered']
    #allocation3 [shape = 's32[2]{0}', space=sflag, size = 0x8, scoped, tag = 'scoped memory for ssim_and_photometric.1']
    #allocation4 [shape = 's32[2]{0}', space=sflag, size = 0x8, scoped, tag = 'scoped memory for ssim_and_photometric.1']
    #allocation5 [shape = 'u8[65536]{0}', space=vmem, size = 0x10000, scoped, tag = 'input window, operand 1, single buffered']
    #allocation6 [shape = 's32[1]{0}', space=sflag, size = 0x4, scoped, tag = 'scoped memory for ssim_and_photometric.1']
    #allocation7 [shape = 'u8[65536]{0}', space=vmem, size = 0x10000, scoped, tag = 'input window, operand 2']
    #allocation8 [shape = 'u8[65536]{0}', space=vmem, size = 0x10000, scoped, tag = 'input window, operand 3']
    #allocation9 [shape = 'u8[65536]{0}', space=vmem, size = 0x10000, scoped, tag = 'output window, operand 0']
    #allocation10 [shape = 'u8[65536]{0}', space=vmem, size = 0x10000, scoped, tag = 'output window, operand 1']
    #allocation11 [shape = 's32[2]{0}', space=sflag, size = 0x8, scoped, tag = 'scoped memory for ssim_and_photometric.1']
    %11 = vsyncpa [#allocation3], 0
    %12 = vsyncpa [#allocation6], 0
    %13 = vsyncpa [#allocation4], 0
    %s14 = scalar_lea.sflag [#allocation4], 1
    %15 = vsyncpa %s14, 0
    %16 = vsyncpa [#allocation11], 0
    %s17 = scalar_lea.sflag [#allocation11], 1
    %18 = vsyncpa %s17, 0
    loop: start=0, step=1, limit=4
    $region2: #{ssim_and_photometric.1} parent=1 // loop_pre_header
      _
    $region3: #{ssim_and_photometric.1} parent=1 // loop_header
      %s20 = sphi 0, %s24
      %p21 = scmp.ge.s32.totalorder %s20, 4
      %s28 = sphi 0, %s28
      %s30 = sphi 0, %s28
      %s31 = sphi 0, %s30
      %s45 = sphi 0, %s31
      %s49 = sphi 0, %s49
      %s51 = sphi 0, %s49
      %s52 = sphi 0, %s51
      %s66 = sphi 0, %s52
      %s72 = sphi 0, %s74
      %s75 = sphi 0, %s72
      %s76 = sphi 0, %s75
      %s92 = sphi 0, %s76
      %s98 = sphi 0, %s100
      %s101 = sphi 0, %s98
      %s102 = sphi 0, %s101
      %s118 = sphi 0, %s102
      %s124 = sphi 0, %s126
      %s127 = sphi 0, %s124
      %s128 = sphi 0, %s127
      %s144 = sphi 0, %s128
      %s150 = sphi 0, %s152
      %s153 = sphi 0, %s150
      %s154 = sphi 0, %s153
      %s170 = sphi 0, %s154
    $region4: #{ssim_and_photometric.1} parent=1 // loop_header_branch
      %23 = sbr.rel (%p21) target = $region8
    $region5: #{ssim_and_photometric.1} parent=1 // loop_body
      %s25 = ssub.s32 %s20, 1
      %s26 = ssub.s32 %s20, 2
      %s27 = sadd.s32 %s20, 1
      %s29 = sadd.s32 %s28, 1
      %p32 = scmp.eq.s32.totalorder %s20, 1
      %p33 = scmp.ne.s32.totalorder %s28, %s30
      %p34 = scmp.eq.s32.totalorder %s20, 0
      %p35 = por %p33, %p34
      %p36 = scmp.ne.s32.totalorder %s28, %s30
      %p37 = scmp.eq.s32.totalorder %s25, 1
      %p38 = por %p36, %p37
      %p39 = scmp.ne.s32.totalorder %s30, %s31
      %p40 = scmp.eq.s32.totalorder %s25, 0
      %p41 = por %p39, %p40
      %p42 = scmp.ne.s32.totalorder %s30, %s31
      %p43 = scmp.eq.s32.totalorder %s26, 1
      %p44 = por %p42, %p43
      %p46 = scmp.ne.s32.totalorder %s31, %s45
      %p47 = scmp.eq.s32.totalorder %s26, 0
      %p48 = por %p46, %p47
      %s50 = sadd.s32 %s49, 1
      %p53 = scmp.eq.s32.totalorder %s20, 1
      %p54 = scmp.ne.s32.totalorder %s49, %s51
      %p55 = scmp.eq.s32.totalorder %s20, 0
      %p56 = por %p54, %p55
      %p57 = scmp.ne.s32.totalorder %s49, %s51
      %p58 = scmp.eq.s32.totalorder %s25, 1
      %p59 = por %p57, %p58
      %p60 = scmp.ne.s32.totalorder %s51, %s52
      %p61 = scmp.eq.s32.totalorder %s25, 0
      %p62 = por %p60, %p61
      %p63 = scmp.ne.s32.totalorder %s51, %s52
      %p64 = scmp.eq.s32.totalorder %s26, 1
      %p65 = por %p63, %p64
      %p67 = scmp.ne.s32.totalorder %s52, %s66
      %p68 = scmp.eq.s32.totalorder %s26, 0
      %p69 = por %p67, %p68
      %s70 = ssub.s32 %s20, %s27
      %p71 = scmp.eq.s32.totalorder %s70, 0
      %s73 = sadd.s32 %s72, 1
      %s74 = scalar_select %p71, %s72, %s73
      %p77 = pneg %p71
      %p78 = scmp.eq.s32.totalorder %s20, 1
      %p79 = por %p77, %p78
      %p80 = scmp.ne.s32.totalorder %s72, %s75
      %p81 = scmp.eq.s32.totalorder %s20, 0
      %p82 = por %p80, %p81
      %p83 = scmp.ne.s32.totalorder %s72, %s75
      %p84 = scmp.eq.s32.totalorder %s25, 1
      %p85 = por %p83, %p84
      %p86 = scmp.ne.s32.totalorder %s75, %s76
      %p87 = scmp.eq.s32.totalorder %s25, 0
      %p88 = por %p86, %p87
      %p89 = scmp.ne.s32.totalorder %s75, %s76
      %p90 = scmp.eq.s32.totalorder %s26, 1
      %p91 = por %p89, %p90
      %p93 = scmp.ne.s32.totalorder %s76, %s92
      %p94 = scmp.eq.s32.totalorder %s26, 0
      %p95 = por %p93, %p94
      %s96 = ssub.s32 %s20, %s27
      %p97 = scmp.eq.s32.totalorder %s96, 0
      %s99 = sadd.s32 %s98, 1
      %s100 = scalar_select %p97, %s98, %s99
      %p103 = pneg %p97
      %p104 = scmp.eq.s32.totalorder %s20, 1
      %p105 = por %p103, %p104
      %p106 = scmp.ne.s32.totalorder %s98, %s101
      %p107 = scmp.eq.s32.totalorder %s20, 0
      %p108 = por %p106, %p107
      %p109 = scmp.ne.s32.totalorder %s98, %s101
      %p110 = scmp.eq.s32.totalorder %s25, 1
      %p111 = por %p109, %p110
      %p112 = scmp.ne.s32.totalorder %s101, %s102
      %p113 = scmp.eq.s32.totalorder %s25, 0
      %p114 = por %p112, %p113
      %p115 = scmp.ne.s32.totalorder %s101, %s102
      %p116 = scmp.eq.s32.totalorder %s26, 1
      %p117 = por %p115, %p116
      %p119 = scmp.ne.s32.totalorder %s102, %s118
      %p120 = scmp.eq.s32.totalorder %s26, 0
      %p121 = por %p119, %p120
      %s122 = ssub.s32 %s20, %s27
      %p123 = scmp.eq.s32.totalorder %s122, 0
      %s125 = sadd.s32 %s124, 1
      %s126 = scalar_select %p123, %s124, %s125
      %p129 = pneg %p123
      %p130 = scmp.eq.s32.totalorder %s20, 1
      %p131 = por %p129, %p130
      %p132 = scmp.ne.s32.totalorder %s124, %s127
      %p133 = scmp.eq.s32.totalorder %s20, 0
      %p134 = por %p132, %p133
      %p135 = scmp.ne.s32.totalorder %s124, %s127
      %p136 = scmp.eq.s32.totalorder %s25, 1
      %p137 = por %p135, %p136
      %p138 = scmp.ne.s32.totalorder %s127, %s128
      %p139 = scmp.eq.s32.totalorder %s25, 0
      %p140 = por %p138, %p139
      %p141 = scmp.ne.s32.totalorder %s127, %s128
      %p142 = scmp.eq.s32.totalorder %s26, 1
      %p143 = por %p141, %p142
      %p145 = scmp.ne.s32.totalorder %s128, %s144
      %p146 = scmp.eq.s32.totalorder %s26, 0
      %p147 = por %p145, %p146
      %s148 = ssub.s32 %s20, %s27
      %p149 = scmp.eq.s32.totalorder %s148, 0
      %s151 = sadd.s32 %s150, 1
      %s152 = scalar_select %p149, %s150, %s151
      %p155 = pneg %p149
      %p156 = scmp.eq.s32.totalorder %s20, 1
      %p157 = por %p155, %p156
      %p158 = scmp.ne.s32.totalorder %s150, %s153
      %p159 = scmp.eq.s32.totalorder %s20, 0
      %p160 = por %p158, %p159
      %p161 = scmp.ne.s32.totalorder %s150, %s153
      %p162 = scmp.eq.s32.totalorder %s25, 1
      %p163 = por %p161, %p162
      %p164 = scmp.ne.s32.totalorder %s153, %s154
      %p165 = scmp.eq.s32.totalorder %s25, 0
      %p166 = por %p164, %p165
      %p167 = scmp.ne.s32.totalorder %s153, %s154
      %p168 = scmp.eq.s32.totalorder %s26, 1
      %p169 = por %p167, %p168
      %p171 = scmp.ne.s32.totalorder %s154, %s170
      %p172 = scmp.eq.s32.totalorder %s26, 0
      %p173 = por %p171, %p172
      %p174 = scmp.le.s32.totalorder 1, %s20
      %p175 = scmp.lt.s32.totalorder %s20, 3
      %p176 = pnand %p174, %p175
      %p177 = pneg %p176
      // Predicated region
      $region9: #{ssim_and_photometric.1} parent=5 // pred_check
        _
      $region10: #{ssim_and_photometric.1} parent=5 // pred_check_branch
        %179 = sbr.rel (%p176) target = $region12
      $region11: #{ssim_and_photometric.1} parent=5 // pred_region
        %s180 = ssub.s32 %s20, 1
        // Predicated region
        $region13: #{ssim_and_photometric.1} parent=11 // pred_check
          %p181 = pneg %p41
        $region14: #{ssim_and_photometric.1} parent=11 // pred_check_branch
          %183 = sbr.rel (%p181) target = $region16
        $region15: #{ssim_and_photometric.1} parent=11 // pred_region
          %185 = vsyncadd [#allocation3], 0
          %s186 = sshll.u32 %s0, 4
          %s187 = int_to_ptr.hbm [resolvable:$true] %s186
          %s188 = sshll.u32 [#allocation2], 4
          %s189 = int_to_ptr.vmem [resolvable:$true] %s188
          %194 = dma.hbm_to_vmem [thread:$0]  %s187, 1024, %s189, [#allocation3], 128, 128, 8
        $region16: #{ssim_and_photometric.1} parent=11 // pred_fallthru
          _
        // Predicated region
        $region17: #{ssim_and_photometric.1} parent=11 // pred_check
          %p195 = pneg %p62
        $region18: #{ssim_and_photometric.1} parent=11 // pred_check_branch
          %197 = sbr.rel (%p195) target = $region20
        $region19: #{ssim_and_photometric.1} parent=11 // pred_region
          %199 = vsyncadd [#allocation6], 0
          %s200 = sshll.u32 %s1, 4
          %s201 = int_to_ptr.hbm [resolvable:$true] %s200
          %s202 = sshll.u32 [#allocation5], 4
          %s203 = int_to_ptr.vmem [resolvable:$true] %s202
          %208 = dma.hbm_to_vmem [thread:$0]  %s201, 2048, %s203, [#allocation6], 128, 128, 8
        $region20: #{ssim_and_photometric.1} parent=11 // pred_fallthru
          _
      $region12: #{ssim_and_photometric.1} parent=5 // pred_fallthru
        _
      %p209 = scmp.lt.s32.totalorder %s20, 2
      // Predicated region
      $region21: #{ssim_and_photometric.1} parent=5 // pred_check
        %p210 = pneg %p209
      $region22: #{ssim_and_photometric.1} parent=5 // pred_check_branch
        %212 = sbr.rel (%p210) target = $region24
      $region23: #{ssim_and_photometric.1} parent=5 // pred_region
        // Predicated region
        $region25: #{ssim_and_photometric.1} parent=23 // pred_check
          %p213 = pneg %p82
        $region26: #{ssim_and_photometric.1} parent=23 // pred_check_branch
          %215 = sbr.rel (%p213) target = $region28
        $region27: #{ssim_and_photometric.1} parent=23 // pred_region
          %s216 = sand.u32 %s20, 1
          %s217 = scalar_lea.sflag [#allocation3], %s216
          %s218 = sand.u32 %s72, 1
          %s219 = smul.addr %s218, 64
          %s220 = scalar_lea.vmem [#allocation7], %s219
          %s221 = smul.u32 4, %s20
          %223 = vsyncadd %s217, 0
          %s224 = smul.addr %s221, 2
          %s225 = smul.addr %s224, 8
          %s226 = scalar_lea.hbm %s2, %s225
          %s227 = sshll.u32 %s226, 4
          %s228 = int_to_ptr.hbm [resolvable:$true] %s227
          %s229 = sshll.u32 %s220, 4
          %s230 = int_to_ptr.vmem [resolvable:$true] %s229
          %235 = dma.hbm_to_vmem [thread:$0]  %s228, 1024, %s230, %s217, 128, 128, 8
        $region28: #{ssim_and_photometric.1} parent=23 // pred_fallthru
          _
        // Predicated region
        $region29: #{ssim_and_photometric.1} parent=23 // pred_check
          %p236 = pneg %p108
        $region30: #{ssim_and_photometric.1} parent=23 // pred_check_branch
          %238 = sbr.rel (%p236) target = $region32
        $region31: #{ssim_and_photometric.1} parent=23 // pred_region
          %s239 = sand.u32 %s20, 1
          %s240 = scalar_lea.sflag [#allocation3], %s239
          %s241 = sand.u32 %s98, 1
          %s242 = smul.addr %s241, 64
          %s243 = scalar_lea.vmem [#allocation8], %s242
          %s244 = smul.u32 4, %s20
          %246 = vsyncadd %s240, 0
          %s247 = smul.addr %s244, 2
          %s248 = smul.addr %s247, 8
          %s249 = scalar_lea.hbm %s3, %s248
          %s250 = sshll.u32 %s249, 4
          %s251 = int_to_ptr.hbm [resolvable:$true] %s250
          %s252 = sshll.u32 %s243, 4
          %s253 = int_to_ptr.vmem [resolvable:$true] %s252
          %258 = dma.hbm_to_vmem [thread:$0]  %s251, 1024, %s253, %s240, 128, 128, 8
        $region32: #{ssim_and_photometric.1} parent=23 // pred_fallthru
          _
      $region24: #{ssim_and_photometric.1} parent=5 // pred_fallthru
        _
      %p259 = scmp.le.s32.totalorder 1, %s20
      %p260 = scmp.lt.s32.totalorder %s20, 3
      %p261 = pnand %p259, %p260
      %p262 = pneg %p261
      // Predicated region
      $region33: #{ssim_and_photometric.1} parent=5 // pred_check
        _
      $region34: #{ssim_and_photometric.1} parent=5 // pred_check_branch
        %264 = sbr.rel (%p261) target = $region36
      $region35: #{ssim_and_photometric.1} parent=5 // pred_region
        %s265 = ssub.s32 %s20, 1
        // Predicated region
        $region37: #{ssim_and_photometric.1} parent=35 // pred_check
          %p266 = pneg %p41
        $region38: #{ssim_and_photometric.1} parent=35 // pred_check_branch
          %268 = sbr.rel (%p266) target = $region40
        $region39: #{ssim_and_photometric.1} parent=35 // pred_region
          %270 = dma.done [#allocation3], 1024
        $region40: #{ssim_and_photometric.1} parent=35 // pred_fallthru
          _
        // Predicated region
        $region41: #{ssim_and_photometric.1} parent=35 // pred_check
          %p271 = pneg %p62
        $region42: #{ssim_and_photometric.1} parent=35 // pred_check_branch
          %273 = sbr.rel (%p271) target = $region44
        $region43: #{ssim_and_photometric.1} parent=35 // pred_region
          %275 = dma.done [#allocation6], 2048
        $region44: #{ssim_and_photometric.1} parent=35 // pred_fallthru
          _
        %s276 = sand.u32 %s25, 1
        %s277 = scalar_lea.sflag [#allocation3], %s276
        %s278 = sand.u32 %s75, 1
        %s279 = smul.addr %s278, 64
        %s280 = scalar_lea.vmem [#allocation7], %s279
        // Predicated region
        $region45: #{ssim_and_photometric.1} parent=35 // pred_check
          %p281 = pneg %p88
        $region46: #{ssim_and_photometric.1} parent=35 // pred_check_branch
          %283 = sbr.rel (%p281) target = $region48
        $region47: #{ssim_and_photometric.1} parent=35 // pred_region
          %285 = dma.done %s277, 1024
        $region48: #{ssim_and_photometric.1} parent=35 // pred_fallthru
          _
        %s286 = sand.u32 %s25, 1
        %s287 = scalar_lea.sflag [#allocation3], %s286
        %s288 = sand.u32 %s101, 1
        %s289 = smul.addr %s288, 64
        %s290 = scalar_lea.vmem [#allocation8], %s289
        // Predicated region
        $region49: #{ssim_and_photometric.1} parent=35 // pred_check
          %p291 = pneg %p114
        $region50: #{ssim_and_photometric.1} parent=35 // pred_check_branch
          %293 = sbr.rel (%p291) target = $region52
        $region51: #{ssim_and_photometric.1} parent=35 // pred_region
          %295 = dma.done %s287, 1024
        $region52: #{ssim_and_photometric.1} parent=35 // pred_fallthru
          _
        %p296 = pneg %p41
        %p297 = pneg %p38
        %p298 = pneg %p62
        %p299 = pneg %p59
        %s300 = sand.u32 %s25, 1
        %s301 = scalar_lea.sflag [#allocation3], %s300
        %s302 = sand.u32 %s75, 1
        %s303 = smul.addr %s302, 64
        %s304 = scalar_lea.vmem [#allocation7], %s303
        %p305 = pneg %p88
        %p306 = pneg %p85
        %s307 = sand.u32 %s25, 1
        %s308 = scalar_lea.sflag [#allocation3], %s307
        %s309 = sand.u32 %s101, 1
        %s310 = smul.addr %s309, 64
        %s311 = scalar_lea.vmem [#allocation8], %s310
        %p312 = pneg %p114
        %p313 = pneg %p111
        %p314 = pneg %p140
        %p315 = pneg %p137
        %s316 = sand.u32 %s127, 1
        %s317 = scalar_lea.sflag [#allocation4], %s316
        %s318 = sand.u32 %s127, 1
        %s319 = smul.addr %s318, 64
        %s320 = scalar_lea.vmem [#allocation9], %s319
        %p321 = pneg %p166
        %p322 = pneg %p163
        %s323 = sand.u32 %s153, 1
        %s324 = scalar_lea.sflag [#allocation11], %s323
        %s325 = sand.u32 %s153, 1
        %s326 = smul.addr %s325, 64
        %s327 = scalar_lea.vmem [#allocation10], %s326
        %s328 = smul.u32 4, %s25
        %s329 = smul.u32 4, %s25
        %s330 = smul.u32 4, %s25
        %s331 = smul.u32 4, %s25
        %v332 = vld [vmem:[%s280] sm:$0xff]
        %v333 = vld [vmem:[%s280 + $0x8] sm:$0xff]
        %v334 = vld [vmem:[%s280 + $0x10] sm:$0xff]
        %v335 = vld [vmem:[%s280 + $0x18] sm:$0xff]
        %v336 = vld [vmem:[%s280 + $0x20] sm:$0xff]
        %v337 = vld [vmem:[%s280 + $0x28] sm:$0xff]
        %v338 = vld [vmem:[%s280 + $0x30] sm:$0xff]
        %v339 = vld [vmem:[%s280 + $0x38] sm:$0xff]
        %v340 = vld [vmem:[%s290] sm:$0xff]
        %v341 = vld [vmem:[%s290 + $0x8] sm:$0xff]
        %v342 = vld [vmem:[%s290 + $0x10] sm:$0xff]
        %v343 = vld [vmem:[%s290 + $0x18] sm:$0xff]
        %v344 = vld [vmem:[%s290 + $0x20] sm:$0xff]
        %v345 = vld [vmem:[%s290 + $0x28] sm:$0xff]
        %v346 = vld [vmem:[%s290 + $0x30] sm:$0xff]
        %v347 = vld [vmem:[%s290 + $0x38] sm:$0xff]
        %v348 = vld [vmem:[#allocation2] sm:$0xff]
        %v349 = vld [vmem:[#allocation2 + $0x8] sm:$0xff]
        %v350 = vld [vmem:[#allocation2 + $0x10] sm:$0xff]
        %v351 = vld [vmem:[#allocation2 + $0x18] sm:$0xff]
        %v352 = vld [vmem:[#allocation2 + $0x20] sm:$0xff]
        %v353 = vld [vmem:[#allocation2 + $0x28] sm:$0xff]
        %v354 = vld [vmem:[#allocation2 + $0x30] sm:$0xff]
        %v355 = vld [vmem:[#allocation2 + $0x38] sm:$0xff]
        %v356 = vld [vmem:[#allocation5] sm:$0xff]
        %v357 = vld [vmem:[#allocation5 + $0x8] sm:$0xff]
        %v358 = vld [vmem:[#allocation5 + $0x10] sm:$0xff]
        %v359 = vld [vmem:[#allocation5 + $0x18] sm:$0xff]
        %v360 = vld [vmem:[#allocation5 + $0x20] sm:$0xff]
        %v361 = vld [vmem:[#allocation5 + $0x28] sm:$0xff]
        %v362 = vld [vmem:[#allocation5 + $0x30] sm:$0xff]
        %v363 = vld [vmem:[#allocation5 + $0x38] sm:$0xff]
        %v364 = vld [vmem:[#allocation5 + $0x40] sm:$0xff]
        %v365 = vld [vmem:[#allocation5 + $0x48] sm:$0xff]
        %v366 = vld [vmem:[#allocation5 + $0x50] sm:$0xff]
        %v367 = vld [vmem:[#allocation5 + $0x58] sm:$0xff]
        %v368 = vld [vmem:[#allocation5 + $0x60] sm:$0xff]
        %v369 = vld [vmem:[#allocation5 + $0x68] sm:$0xff]
        %v370 = vld [vmem:[#allocation5 + $0x70] sm:$0xff]
        %v371 = vld [vmem:[#allocation5 + $0x78] sm:$0xff]
        %372 = vmatpush.msra.mxu0 %v371
        %373 = vmatpush.msra.mxu0 %v370
        %374 = vmatpush.msra.mxu0 %v369
        %375 = vmatpush.msra.mxu0 %v368
        %376 = vmatpush.msra.mxu0 %v367
        %377 = vmatpush.msra.mxu0 %v366
        %378 = vmatpush.msra.mxu0 %v365
        %379 = vmatpush.msra.mxu0 %v364
        %380 = vmatpush.msra.mxu0 %v363
        %381 = vmatpush.msra.mxu0 %v362
        %382 = vmatpush.msra.mxu0 %v361
        %383 = vmatpush.msra.mxu0 %v360
        %384 = vmatpush.msra.mxu0 %v359
        %385 = vmatpush.msra.mxu0 %v358
        %386 = vmatpush.msra.mxu0 %v357
        %387 = vmatpush.msra.mxu0 %v356
        %388 = vmatmul.f32.gmra.mxu0 %v332
        %v389 = vpop.f32.mrf.mxu0
        %v390 = vadd.f32 0.0, %v389
        %391 = vmatmul.f32.gmra.mxu0 %v333
        %v392 = vpop.f32.mrf.mxu0
        %v393 = vadd.f32 0.0, %v392
        %394 = vmatmul.f32.gmra.mxu0 %v334
        %v395 = vpop.f32.mrf.mxu0
        %v396 = vadd.f32 0.0, %v395
        %397 = vmatmul.f32.gmra.mxu0 %v335
        %v398 = vpop.f32.mrf.mxu0
        %v399 = vadd.f32 0.0, %v398
        %400 = vmatmul.f32.gmra.mxu0 %v336
        %v401 = vpop.f32.mrf.mxu0
        %v402 = vadd.f32 0.0, %v401
        %403 = vmatmul.f32.gmra.mxu0 %v337
        %v404 = vpop.f32.mrf.mxu0
        %v405 = vadd.f32 0.0, %v404
        %406 = vmatmul.f32.gmra.mxu0 %v338
        %v407 = vpop.f32.mrf.mxu0
        %v408 = vadd.f32 0.0, %v407
        %409 = vmatmul.f32.gmra.mxu0 %v339
        %v410 = vpop.f32.mrf.mxu0
        %v411 = vadd.f32 0.0, %v410
        %412 = vdwg.mxu0
        %vm413 = vcmask 523264
        %v415 = vsel %vm413, %v348, 0
        %v418 = vsel %vm413, %v349, 0
        %v421 = vsel %vm413, %v350, 0
        %v424 = vsel %vm413, %v351, 0
        %v427 = vsel %vm413, %v352, 0
        %v430 = vsel %vm413, %v353, 0
        %v433 = vsel %vm413, %v354, 0
        %v436 = vsel %vm413, %v355, 0
        %438 = vmatpush.msra.mxu0 0.0
        %439 = vmatpush.msra.mxu0 0.0
        %440 = vmatpush.msra.mxu0 0.0
        %441 = vmatpush.msra.mxu0 0.0
        %442 = vmatpush.msra.mxu0 0.0
        %443 = vmatpush.msra.mxu0 0.0
        %444 = vmatpush.msra.mxu0 0.0
        %445 = vmatpush.msra.mxu0 0.0
        %446 = vmatpush.msra.mxu0 %v411
        %447 = vmatpush.msra.mxu0 %v408
        %448 = vmatpush.msra.mxu0 %v405
        %449 = vmatpush.msra.mxu0 %v402
        %450 = vmatpush.msra.mxu0 %v399
        %451 = vmatpush.msra.mxu0 %v396
        %452 = vmatpush.msra.mxu0 %v393
        %453 = vmatpush.msra.mxu0 %v390
        %454 = vmatmul.f32.gmra.mxu0 %v415
        %v455 = vpop.f32.mrf.mxu0
        %v456 = vadd.f32 0.0, %v455
        %457 = vmatmul.f32.gmra.mxu0 %v418
        %v458 = vpop.f32.mrf.mxu0
        %v459 = vadd.f32 0.0, %v458
        %460 = vmatmul.f32.gmra.mxu0 %v421
        %v461 = vpop.f32.mrf.mxu0
        %v462 = vadd.f32 0.0, %v461
        %463 = vmatmul.f32.gmra.mxu0 %v424
        %v464 = vpop.f32.mrf.mxu0
        %v465 = vadd.f32 0.0, %v464
        %466 = vmatmul.f32.gmra.mxu0 %v427
        %v467 = vpop.f32.mrf.mxu0
        %v468 = vadd.f32 0.0, %v467
        %469 = vmatmul.f32.gmra.mxu0 %v430
        %v470 = vpop.f32.mrf.mxu0
        %v471 = vadd.f32 0.0, %v470
        %472 = vmatmul.f32.gmra.mxu0 %v433
        %v473 = vpop.f32.mrf.mxu0
        %v474 = vadd.f32 0.0, %v473
        %475 = vmatmul.f32.gmra.mxu0 %v436
        %v476 = vpop.f32.mrf.mxu0
        %v477 = vadd.f32 0.0, %v476
        %478 = vdwg.mxu0
        %v479 = vmul.f32 %v456, 0.020408163
        %v480 = vmul.f32 %v459, 0.020408163
        %v481 = vmul.f32 %v462, 0.020408163
        %v482 = vmul.f32 %v465, 0.020408163
        %v483 = vmul.f32 %v468, 0.020408163
        %v484 = vmul.f32 %v471, 0.020408163
        %v485 = vmul.f32 %v474, 0.020408163
        %v486 = vmul.f32 %v477, 0.020408163
        %487 = vmatpush.msra.mxu0 %v371
        %488 = vmatpush.msra.mxu0 %v370
        %489 = vmatpush.msra.mxu0 %v369
        %490 = vmatpush.msra.mxu0 %v368
        %491 = vmatpush.msra.mxu0 %v367
        %492 = vmatpush.msra.mxu0 %v366
        %493 = vmatpush.msra.mxu0 %v365
        %494 = vmatpush.msra.mxu0 %v364
        %495 = vmatpush.msra.mxu0 %v363
        %496 = vmatpush.msra.mxu0 %v362
        %497 = vmatpush.msra.mxu0 %v361
        %498 = vmatpush.msra.mxu0 %v360
        %499 = vmatpush.msra.mxu0 %v359
        %500 = vmatpush.msra.mxu0 %v358
        %501 = vmatpush.msra.mxu0 %v357
        %502 = vmatpush.msra.mxu0 %v356
        %503 = vmatmul.f32.gmra.mxu0 %v340
        %v504 = vpop.f32.mrf.mxu0
        %v505 = vadd.f32 0.0, %v504
        %506 = vmatmul.f32.gmra.mxu0 %v341
        %v507 = vpop.f32.mrf.mxu0
        %v508 = vadd.f32 0.0, %v507
        %509 = vmatmul.f32.gmra.mxu0 %v342
        %v510 = vpop.f32.mrf.mxu0
        %v511 = vadd.f32 0.0, %v510
        %512 = vmatmul.f32.gmra.mxu0 %v343
        %v513 = vpop.f32.mrf.mxu0
        %v514 = vadd.f32 0.0, %v513
        %515 = vmatmul.f32.gmra.mxu0 %v344
        %v516 = vpop.f32.mrf.mxu0
        %v517 = vadd.f32 0.0, %v516
        %518 = vmatmul.f32.gmra.mxu0 %v345
        %v519 = vpop.f32.mrf.mxu0
        %v520 = vadd.f32 0.0, %v519
        %521 = vmatmul.f32.gmra.mxu0 %v346
        %v522 = vpop.f32.mrf.mxu0
        %v523 = vadd.f32 0.0, %v522
        %524 = vmatmul.f32.gmra.mxu0 %v347
        %v525 = vpop.f32.mrf.mxu0
        %v526 = vadd.f32 0.0, %v525
        %527 = vdwg.mxu0
        %528 = vmatpush.msra.mxu0 0.0
        %529 = vmatpush.msra.mxu0 0.0
        %530 = vmatpush.msra.mxu0 0.0
        %531 = vmatpush.msra.mxu0 0.0
        %532 = vmatpush.msra.mxu0 0.0
        %533 = vmatpush.msra.mxu0 0.0
        %534 = vmatpush.msra.mxu0 0.0
        %535 = vmatpush.msra.mxu0 0.0
        %536 = vmatpush.msra.mxu0 %v526
        %537 = vmatpush.msra.mxu0 %v523
        %538 = vmatpush.msra.mxu0 %v520
        %539 = vmatpush.msra.mxu0 %v517
        %540 = vmatpush.msra.mxu0 %v514
        %541 = vmatpush.msra.mxu0 %v511
        %542 = vmatpush.msra.mxu0 %v508
        %543 = vmatpush.msra.mxu0 %v505
        %544 = vmatmul.f32.gmra.mxu0 %v415
        %v545 = vpop.f32.mrf.mxu0
        %v546 = vadd.f32 0.0, %v545
        %547 = vmatmul.f32.gmra.mxu0 %v418
        %v548 = vpop.f32.mrf.mxu0
        %v549 = vadd.f32 0.0, %v548
        %550 = vmatmul.f32.gmra.mxu0 %v421
        %v551 = vpop.f32.mrf.mxu0
        %v552 = vadd.f32 0.0, %v551
        %553 = vmatmul.f32.gmra.mxu0 %v424
        %v554 = vpop.f32.mrf.mxu0
        %v555 = vadd.f32 0.0, %v554
        %556 = vmatmul.f32.gmra.mxu0 %v427
        %v557 = vpop.f32.mrf.mxu0
        %v558 = vadd.f32 0.0, %v557
        %559 = vmatmul.f32.gmra.mxu0 %v430
        %v560 = vpop.f32.mrf.mxu0
        %v561 = vadd.f32 0.0, %v560
        %562 = vmatmul.f32.gmra.mxu0 %v433
        %v563 = vpop.f32.mrf.mxu0
        %v564 = vadd.f32 0.0, %v563
        %565 = vmatmul.f32.gmra.mxu0 %v436
        %v566 = vpop.f32.mrf.mxu0
        %v567 = vadd.f32 0.0, %v566
        %568 = vdwg.mxu0
        %v569 = vmul.f32 %v546, 0.020408163
        %v570 = vmul.f32 %v549, 0.020408163
        %v571 = vmul.f32 %v552, 0.020408163
        %v572 = vmul.f32 %v555, 0.020408163
        %v573 = vmul.f32 %v558, 0.020408163
        %v574 = vmul.f32 %v561, 0.020408163
        %v575 = vmul.f32 %v564, 0.020408163
        %v576 = vmul.f32 %v567, 0.020408163
        %v577 = vmul.f32 %v332, %v332
        %v578 = vmul.f32 %v333, %v333
        %v579 = vmul.f32 %v334, %v334
        %v580 = vmul.f32 %v335, %v335
        %v581 = vmul.f32 %v336, %v336
        %v582 = vmul.f32 %v337, %v337
        %v583 = vmul.f32 %v338, %v338
        %v584 = vmul.f32 %v339, %v339
        %585 = vmatpush.msra.mxu0 %v371
        %586 = vmatpush.msra.mxu0 %v370
        %587 = vmatpush.msra.mxu0 %v369
        %588 = vmatpush.msra.mxu0 %v368
        %589 = vmatpush.msra.mxu0 %v367
        %590 = vmatpush.msra.mxu0 %v366
        %591 = vmatpush.msra.mxu0 %v365
        %592 = vmatpush.msra.mxu0 %v364
        %593 = vmatpush.msra.mxu0 %v363
        %594 = vmatpush.msra.mxu0 %v362
        %595 = vmatpush.msra.mxu0 %v361
        %596 = vmatpush.msra.mxu0 %v360
        %597 = vmatpush.msra.mxu0 %v359
        %598 = vmatpush.msra.mxu0 %v358
        %599 = vmatpush.msra.mxu0 %v357
        %600 = vmatpush.msra.mxu0 %v356
        %601 = vmatmul.f32.gmra.mxu0 %v577
        %v602 = vpop.f32.mrf.mxu0
        %v603 = vadd.f32 0.0, %v602
        %604 = vmatmul.f32.gmra.mxu0 %v578
        %v605 = vpop.f32.mrf.mxu0
        %v606 = vadd.f32 0.0, %v605
        %607 = vmatmul.f32.gmra.mxu0 %v579
        %v608 = vpop.f32.mrf.mxu0
        %v609 = vadd.f32 0.0, %v608
        %610 = vmatmul.f32.gmra.mxu0 %v580
        %v611 = vpop.f32.mrf.mxu0
        %v612 = vadd.f32 0.0, %v611
        %613 = vmatmul.f32.gmra.mxu0 %v581
        %v614 = vpop.f32.mrf.mxu0
        %v615 = vadd.f32 0.0, %v614
        %616 = vmatmul.f32.gmra.mxu0 %v582
        %v617 = vpop.f32.mrf.mxu0
        %v618 = vadd.f32 0.0, %v617
        %619 = vmatmul.f32.gmra.mxu0 %v583
        %v620 = vpop.f32.mrf.mxu0
        %v621 = vadd.f32 0.0, %v620
        %622 = vmatmul.f32.gmra.mxu0 %v584
        %v623 = vpop.f32.mrf.mxu0
        %v624 = vadd.f32 0.0, %v623
        %625 = vdwg.mxu0
        %626 = vmatpush.msra.mxu0 0.0
        %627 = vmatpush.msra.mxu0 0.0
        %628 = vmatpush.msra.mxu0 0.0
        %629 = vmatpush.msra.mxu0 0.0
        %630 = vmatpush.msra.mxu0 0.0
        %631 = vmatpush.msra.mxu0 0.0
        %632 = vmatpush.msra.mxu0 0.0
        %633 = vmatpush.msra.mxu0 0.0
        %634 = vmatpush.msra.mxu0 %v624
        %635 = vmatpush.msra.mxu0 %v621
        %636 = vmatpush.msra.mxu0 %v618
        %637 = vmatpush.msra.mxu0 %v615
        %638 = vmatpush.msra.mxu0 %v612
        %639 = vmatpush.msra.mxu0 %v609
        %640 = vmatpush.msra.mxu0 %v606
        %641 = vmatpush.msra.mxu0 %v603
        %642 = vmatmul.f32.gmra.mxu0 %v415
        %v643 = vpop.f32.mrf.mxu0
        %v644 = vadd.f32 0.0, %v643
        %645 = vmatmul.f32.gmra.mxu0 %v418
        %v646 = vpop.f32.mrf.mxu0
        %v647 = vadd.f32 0.0, %v646
        %648 = vmatmul.f32.gmra.mxu0 %v421
        %v649 = vpop.f32.mrf.mxu0
        %v650 = vadd.f32 0.0, %v649
        %651 = vmatmul.f32.gmra.mxu0 %v424
        %v652 = vpop.f32.mrf.mxu0
        %v653 = vadd.f32 0.0, %v652
        %654 = vmatmul.f32.gmra.mxu0 %v427
        %v655 = vpop.f32.mrf.mxu0
        %v656 = vadd.f32 0.0, %v655
        %657 = vmatmul.f32.gmra.mxu0 %v430
        %v658 = vpop.f32.mrf.mxu0
        %v659 = vadd.f32 0.0, %v658
        %660 = vmatmul.f32.gmra.mxu0 %v433
        %v661 = vpop.f32.mrf.mxu0
        %v662 = vadd.f32 0.0, %v661
        %663 = vmatmul.f32.gmra.mxu0 %v436
        %v664 = vpop.f32.mrf.mxu0
        %v665 = vadd.f32 0.0, %v664
        %666 = vdwg.mxu0
        %v667 = vmul.f32 %v644, 0.020408163
        %v668 = vmul.f32 %v647, 0.020408163
        %v669 = vmul.f32 %v650, 0.020408163
        %v670 = vmul.f32 %v653, 0.020408163
        %v671 = vmul.f32 %v656, 0.020408163
        %v672 = vmul.f32 %v659, 0.020408163
        %v673 = vmul.f32 %v662, 0.020408163
        %v674 = vmul.f32 %v665, 0.020408163
        %v675 = vmul.f32 %v340, %v340
        %v676 = vmul.f32 %v341, %v341
        %v677 = vmul.f32 %v342, %v342
        %v678 = vmul.f32 %v343, %v343
        %v679 = vmul.f32 %v344, %v344
        %v680 = vmul.f32 %v345, %v345
        %v681 = vmul.f32 %v346, %v346
        %v682 = vmul.f32 %v347, %v347
        %683 = vmatpush.msra.mxu0 %v371
        %684 = vmatpush.msra.mxu0 %v370
        %685 = vmatpush.msra.mxu0 %v369
        %686 = vmatpush.msra.mxu0 %v368
        %687 = vmatpush.msra.mxu0 %v367
        %688 = vmatpush.msra.mxu0 %v366
        %689 = vmatpush.msra.mxu0 %v365
        %690 = vmatpush.msra.mxu0 %v364
        %691 = vmatpush.msra.mxu0 %v363
        %692 = vmatpush.msra.mxu0 %v362
        %693 = vmatpush.msra.mxu0 %v361
        %694 = vmatpush.msra.mxu0 %v360
        %695 = vmatpush.msra.mxu0 %v359
        %696 = vmatpush.msra.mxu0 %v358
        %697 = vmatpush.msra.mxu0 %v357
        %698 = vmatpush.msra.mxu0 %v356
        %699 = vmatmul.f32.gmra.mxu0 %v675
        %v700 = vpop.f32.mrf.mxu0
        %v701 = vadd.f32 0.0, %v700
        %702 = vmatmul.f32.gmra.mxu0 %v676
        %v703 = vpop.f32.mrf.mxu0
        %v704 = vadd.f32 0.0, %v703
        %705 = vmatmul.f32.gmra.mxu0 %v677
        %v706 = vpop.f32.mrf.mxu0
        %v707 = vadd.f32 0.0, %v706
        %708 = vmatmul.f32.gmra.mxu0 %v678
        %v709 = vpop.f32.mrf.mxu0
        %v710 = vadd.f32 0.0, %v709
        %711 = vmatmul.f32.gmra.mxu0 %v679
        %v712 = vpop.f32.mrf.mxu0
        %v713 = vadd.f32 0.0, %v712
        %714 = vmatmul.f32.gmra.mxu0 %v680
        %v715 = vpop.f32.mrf.mxu0
        %v716 = vadd.f32 0.0, %v715
        %717 = vmatmul.f32.gmra.mxu0 %v681
        %v718 = vpop.f32.mrf.mxu0
        %v719 = vadd.f32 0.0, %v718
        %720 = vmatmul.f32.gmra.mxu0 %v682
        %v721 = vpop.f32.mrf.mxu0
        %v722 = vadd.f32 0.0, %v721
        %723 = vdwg.mxu0
        %724 = vmatpush.msra.mxu0 0.0
        %725 = vmatpush.msra.mxu0 0.0
        %726 = vmatpush.msra.mxu0 0.0
        %727 = vmatpush.msra.mxu0 0.0
        %728 = vmatpush.msra.mxu0 0.0
        %729 = vmatpush.msra.mxu0 0.0
        %730 = vmatpush.msra.mxu0 0.0
        %731 = vmatpush.msra.mxu0 0.0
        %732 = vmatpush.msra.mxu0 %v722
        %733 = vmatpush.msra.mxu0 %v719
        %734 = vmatpush.msra.mxu0 %v716
        %735 = vmatpush.msra.mxu0 %v713
        %736 = vmatpush.msra.mxu0 %v710
        %737 = vmatpush.msra.mxu0 %v707
        %738 = vmatpush.msra.mxu0 %v704
        %739 = vmatpush.msra.mxu0 %v701
        %740 = vmatmul.f32.gmra.mxu0 %v415
        %v741 = vpop.f32.mrf.mxu0
        %v742 = vadd.f32 0.0, %v741
        %743 = vmatmul.f32.gmra.mxu0 %v418
        %v744 = vpop.f32.mrf.mxu0
        %v745 = vadd.f32 0.0, %v744
        %746 = vmatmul.f32.gmra.mxu0 %v421
        %v747 = vpop.f32.mrf.mxu0
        %v748 = vadd.f32 0.0, %v747
        %749 = vmatmul.f32.gmra.mxu0 %v424
        %v750 = vpop.f32.mrf.mxu0
        %v751 = vadd.f32 0.0, %v750
        %752 = vmatmul.f32.gmra.mxu0 %v427
        %v753 = vpop.f32.mrf.mxu0
        %v754 = vadd.f32 0.0, %v753
        %755 = vmatmul.f32.gmra.mxu0 %v430
        %v756 = vpop.f32.mrf.mxu0
        %v757 = vadd.f32 0.0, %v756
        %758 = vmatmul.f32.gmra.mxu0 %v433
        %v759 = vpop.f32.mrf.mxu0
        %v760 = vadd.f32 0.0, %v759
        %761 = vmatmul.f32.gmra.mxu0 %v436
        %v762 = vpop.f32.mrf.mxu0
        %v763 = vadd.f32 0.0, %v762
        %764 = vdwg.mxu0
        %v765 = vmul.f32 %v742, 0.020408163
        %v766 = vmul.f32 %v745, 0.020408163
        %v767 = vmul.f32 %v748, 0.020408163
        %v768 = vmul.f32 %v751, 0.020408163
        %v769 = vmul.f32 %v754, 0.020408163
        %v770 = vmul.f32 %v757, 0.020408163
        %v771 = vmul.f32 %v760, 0.020408163
        %v772 = vmul.f32 %v763, 0.020408163
        %v773 = vmul.f32 %v332, %v340
        %v774 = vmul.f32 %v333, %v341
        %v775 = vmul.f32 %v334, %v342
        %v776 = vmul.f32 %v335, %v343
        %v777 = vmul.f32 %v336, %v344
        %v778 = vmul.f32 %v337, %v345
        %v779 = vmul.f32 %v338, %v346
        %v780 = vmul.f32 %v339, %v347
        %781 = vmatpush.msra.mxu0 %v371
        %782 = vmatpush.msra.mxu0 %v370
        %783 = vmatpush.msra.mxu0 %v369
        %784 = vmatpush.msra.mxu0 %v368
        %785 = vmatpush.msra.mxu0 %v367
        %786 = vmatpush.msra.mxu0 %v366
        %787 = vmatpush.msra.mxu0 %v365
        %788 = vmatpush.msra.mxu0 %v364
        %789 = vmatpush.msra.mxu0 %v363
        %790 = vmatpush.msra.mxu0 %v362
        %791 = vmatpush.msra.mxu0 %v361
        %792 = vmatpush.msra.mxu0 %v360
        %793 = vmatpush.msra.mxu0 %v359
        %794 = vmatpush.msra.mxu0 %v358
        %795 = vmatpush.msra.mxu0 %v357
        %796 = vmatpush.msra.mxu0 %v356
        %797 = vmatmul.f32.gmra.mxu0 %v773
        %v798 = vpop.f32.mrf.mxu0
        %v799 = vadd.f32 0.0, %v798
        %800 = vmatmul.f32.gmra.mxu0 %v774
        %v801 = vpop.f32.mrf.mxu0
        %v802 = vadd.f32 0.0, %v801
        %803 = vmatmul.f32.gmra.mxu0 %v775
        %v804 = vpop.f32.mrf.mxu0
        %v805 = vadd.f32 0.0, %v804
        %806 = vmatmul.f32.gmra.mxu0 %v776
        %v807 = vpop.f32.mrf.mxu0
        %v808 = vadd.f32 0.0, %v807
        %809 = vmatmul.f32.gmra.mxu0 %v777
        %v810 = vpop.f32.mrf.mxu0
        %v811 = vadd.f32 0.0, %v810
        %812 = vmatmul.f32.gmra.mxu0 %v778
        %v813 = vpop.f32.mrf.mxu0
        %v814 = vadd.f32 0.0, %v813
        %815 = vmatmul.f32.gmra.mxu0 %v779
        %v816 = vpop.f32.mrf.mxu0
        %v817 = vadd.f32 0.0, %v816
        %818 = vmatmul.f32.gmra.mxu0 %v780
        %v819 = vpop.f32.mrf.mxu0
        %v820 = vadd.f32 0.0, %v819
        %821 = vdwg.mxu0
        %822 = vmatpush.msra.mxu0 0.0
        %823 = vmatpush.msra.mxu0 0.0
        %824 = vmatpush.msra.mxu0 0.0
        %825 = vmatpush.msra.mxu0 0.0
        %826 = vmatpush.msra.mxu0 0.0
        %827 = vmatpush.msra.mxu0 0.0
        %828 = vmatpush.msra.mxu0 0.0
        %829 = vmatpush.msra.mxu0 0.0
        %830 = vmatpush.msra.mxu0 %v820
        %831 = vmatpush.msra.mxu0 %v817
        %832 = vmatpush.msra.mxu0 %v814
        %833 = vmatpush.msra.mxu0 %v811
        %834 = vmatpush.msra.mxu0 %v808
        %835 = vmatpush.msra.mxu0 %v805
        %836 = vmatpush.msra.mxu0 %v802
        %837 = vmatpush.msra.mxu0 %v799
        %838 = vmatmul.f32.gmra.mxu0 %v415
        %v839 = vpop.f32.mrf.mxu0
        %v840 = vadd.f32 0.0, %v839
        %841 = vmatmul.f32.gmra.mxu0 %v418
        %v842 = vpop.f32.mrf.mxu0
        %v843 = vadd.f32 0.0, %v842
        %844 = vmatmul.f32.gmra.mxu0 %v421
        %v845 = vpop.f32.mrf.mxu0
        %v846 = vadd.f32 0.0, %v845
        %847 = vmatmul.f32.gmra.mxu0 %v424
        %v848 = vpop.f32.mrf.mxu0
        %v849 = vadd.f32 0.0, %v848
        %850 = vmatmul.f32.gmra.mxu0 %v427
        %v851 = vpop.f32.mrf.mxu0
        %v852 = vadd.f32 0.0, %v851
        %853 = vmatmul.f32.gmra.mxu0 %v430
        %v854 = vpop.f32.mrf.mxu0
        %v855 = vadd.f32 0.0, %v854
        %856 = vmatmul.f32.gmra.mxu0 %v433
        %v857 = vpop.f32.mrf.mxu0
        %v858 = vadd.f32 0.0, %v857
        %859 = vmatmul.f32.gmra.mxu0 %v436
        %v860 = vpop.f32.mrf.mxu0
        %v861 = vadd.f32 0.0, %v860
        %862 = vdwg.mxu0
        %v863 = vmul.f32 %v840, 0.020408163
        %v864 = vmul.f32 %v843, 0.020408163
        %v865 = vmul.f32 %v846, 0.020408163
        %v866 = vmul.f32 %v849, 0.020408163
        %v867 = vmul.f32 %v852, 0.020408163
        %v868 = vmul.f32 %v855, 0.020408163
        %v869 = vmul.f32 %v858, 0.020408163
        %v870 = vmul.f32 %v861, 0.020408163
        %v871 = vmul.f32 %v479, %v479
        %v872 = vmul.f32 %v480, %v480
        %v873 = vmul.f32 %v481, %v481
        %v874 = vmul.f32 %v482, %v482
        %v875 = vmul.f32 %v483, %v483
        %v876 = vmul.f32 %v484, %v484
        %v877 = vmul.f32 %v485, %v485
        %v878 = vmul.f32 %v486, %v486
        %v879 = vsub.f32 %v667, %v871
        %v880 = vsub.f32 %v668, %v872
        %v881 = vsub.f32 %v669, %v873
        %v882 = vsub.f32 %v670, %v874
        %v883 = vsub.f32 %v671, %v875
        %v884 = vsub.f32 %v672, %v876
        %v885 = vsub.f32 %v673, %v877
        %v886 = vsub.f32 %v674, %v878
        %v887 = vmul.f32 %v569, %v569
        %v888 = vmul.f32 %v570, %v570
        %v889 = vmul.f32 %v571, %v571
        %v890 = vmul.f32 %v572, %v572
        %v891 = vmul.f32 %v573, %v573
        %v892 = vmul.f32 %v574, %v574
        %v893 = vmul.f32 %v575, %v575
        %v894 = vmul.f32 %v576, %v576
        %v895 = vsub.f32 %v765, %v887
        %v896 = vsub.f32 %v766, %v888
        %v897 = vsub.f32 %v767, %v889
        %v898 = vsub.f32 %v768, %v890
        %v899 = vsub.f32 %v769, %v891
        %v900 = vsub.f32 %v770, %v892
        %v901 = vsub.f32 %v771, %v893
        %v902 = vsub.f32 %v772, %v894
        %v903 = vmul.f32 %v479, %v569
        %v904 = vmul.f32 %v480, %v570
        %v905 = vmul.f32 %v481, %v571
        %v906 = vmul.f32 %v482, %v572
        %v907 = vmul.f32 %v483, %v573
        %v908 = vmul.f32 %v484, %v574
        %v909 = vmul.f32 %v485, %v575
        %v910 = vmul.f32 %v486, %v576
        %v911 = vsub.f32 %v863, %v903
        %v912 = vsub.f32 %v864, %v904
        %v913 = vsub.f32 %v865, %v905
        %v914 = vsub.f32 %v866, %v906
        %v915 = vsub.f32 %v867, %v907
        %v916 = vsub.f32 %v868, %v908
        %v917 = vsub.f32 %v869, %v909
        %v918 = vsub.f32 %v870, %v910
        %v919 = vmul.f32 %v479, 2.0
        %v920 = vmul.f32 %v480, 2.0
        %v921 = vmul.f32 %v481, 2.0
        %v922 = vmul.f32 %v482, 2.0
        %v923 = vmul.f32 %v483, 2.0
        %v924 = vmul.f32 %v484, 2.0
        %v925 = vmul.f32 %v485, 2.0
        %v926 = vmul.f32 %v486, 2.0
        %v927 = vmul.f32 %v919, %v569
        %v928 = vmul.f32 %v920, %v570
        %v929 = vmul.f32 %v921, %v571
        %v930 = vmul.f32 %v922, %v572
        %v931 = vmul.f32 %v923, %v573
        %v932 = vmul.f32 %v924, %v574
        %v933 = vmul.f32 %v925, %v575
        %v934 = vmul.f32 %v926, %v576
        %v935 = vadd.f32 %v927, 0.0001
        %v936 = vadd.f32 %v928, 0.0001
        %v937 = vadd.f32 %v929, 0.0001
        %v938 = vadd.f32 %v930, 0.0001
        %v939 = vadd.f32 %v931, 0.0001
        %v940 = vadd.f32 %v932, 0.0001
        %v941 = vadd.f32 %v933, 0.0001
        %v942 = vadd.f32 %v934, 0.0001
        %v943 = vmul.f32 %v911, 2.0
        %v944 = vmul.f32 %v912, 2.0
        %v945 = vmul.f32 %v913, 2.0
        %v946 = vmul.f32 %v914, 2.0
        %v947 = vmul.f32 %v915, 2.0
        %v948 = vmul.f32 %v916, 2.0
        %v949 = vmul.f32 %v917, 2.0
        %v950 = vmul.f32 %v918, 2.0
        %v951 = vadd.f32 %v943, 0.0009
        %v952 = vadd.f32 %v944, 0.0009
        %v953 = vadd.f32 %v945, 0.0009
        %v954 = vadd.f32 %v946, 0.0009
        %v955 = vadd.f32 %v947, 0.0009
        %v956 = vadd.f32 %v948, 0.0009
        %v957 = vadd.f32 %v949, 0.0009
        %v958 = vadd.f32 %v950, 0.0009
        %v959 = vmul.f32 %v935, %v951
        %v960 = vmul.f32 %v936, %v952
        %v961 = vmul.f32 %v937, %v953
        %v962 = vmul.f32 %v938, %v954
        %v963 = vmul.f32 %v939, %v955
        %v964 = vmul.f32 %v940, %v956
        %v965 = vmul.f32 %v941, %v957
        %v966 = vmul.f32 %v942, %v958
        %v967 = vadd.f32 %v871, %v887
        %v968 = vadd.f32 %v872, %v888
        %v969 = vadd.f32 %v873, %v889
        %v970 = vadd.f32 %v874, %v890
        %v971 = vadd.f32 %v875, %v891
        %v972 = vadd.f32 %v876, %v892
        %v973 = vadd.f32 %v877, %v893
        %v974 = vadd.f32 %v878, %v894
        %v975 = vadd.f32 %v967, 0.0001
        %v976 = vadd.f32 %v968, 0.0001
        %v977 = vadd.f32 %v969, 0.0001
        %v978 = vadd.f32 %v970, 0.0001
        %v979 = vadd.f32 %v971, 0.0001
        %v980 = vadd.f32 %v972, 0.0001
        %v981 = vadd.f32 %v973, 0.0001
        %v982 = vadd.f32 %v974, 0.0001
        %v983 = vadd.f32 %v879, %v895
        %v984 = vadd.f32 %v880, %v896
        %v985 = vadd.f32 %v881, %v897
        %v986 = vadd.f32 %v882, %v898
        %v987 = vadd.f32 %v883, %v899
        %v988 = vadd.f32 %v884, %v900
        %v989 = vadd.f32 %v885, %v901
        %v990 = vadd.f32 %v886, %v902
        %v991 = vadd.f32 %v983, 0.0009
        %v992 = vadd.f32 %v984, 0.0009
        %v993 = vadd.f32 %v985, 0.0009
        %v994 = vadd.f32 %v986, 0.0009
        %v995 = vadd.f32 %v987, 0.0009
        %v996 = vadd.f32 %v988, 0.0009
        %v997 = vadd.f32 %v989, 0.0009
        %v998 = vadd.f32 %v990, 0.0009
        %v999 = vmul.f32 %v975, %v991
        %v1000 = vmul.f32 %v976, %v992
        %v1001 = vmul.f32 %v977, %v993
        %v1002 = vmul.f32 %v978, %v994
        %v1003 = vmul.f32 %v979, %v995
        %v1004 = vmul.f32 %v980, %v996
        %v1005 = vmul.f32 %v981, %v997
        %v1006 = vmul.f32 %v982, %v998
        %v1007 = vrcp.pop %v999
        %v1008 = vmul.f32 %v999, %v1007
        %v1009 = vsub.f32 1.0, %v1008
        %v1010 = vmul.f32 %v1007, %v1009
        %v1011 = vadd.f32 %v1007, %v1010
        %vm1012 = vweird.f32 %v999
        %vm1013 = vweird.f32 %v1007
        %vm1014 = vmor %vm1012, %vm1013
        %v1015 = vsel %vm1014, %v1007, %v1011
        %v1016 = vand.u32 2147483647, %v999
        %vm1017 = vcmp.eq.f32.partialorder %v1016, 8.507059e+37
        %v1018 = vand.u32 %v999, 2147483648
        %v1019 = vor.u32 1.1754944e-38, %v1018
        %v1020 = vsel %vm1017, %v1019, %v1015
        %v1021 = vmul.f32 %v959, %v1020
        %v1022 = vrcp.pop %v1000
        %v1023 = vmul.f32 %v1000, %v1022
        %v1024 = vsub.f32 1.0, %v1023
        %v1025 = vmul.f32 %v1022, %v1024
        %v1026 = vadd.f32 %v1022, %v1025
        %vm1027 = vweird.f32 %v1000
        %vm1028 = vweird.f32 %v1022
        %vm1029 = vmor %vm1027, %vm1028
        %v1030 = vsel %vm1029, %v1022, %v1026
        %v1031 = vand.u32 2147483647, %v1000
        %vm1032 = vcmp.eq.f32.partialorder %v1031, 8.507059e+37
        %v1033 = vand.u32 %v1000, 2147483648
        %v1034 = vor.u32 1.1754944e-38, %v1033
        %v1035 = vsel %vm1032, %v1034, %v1030
        %v1036 = vmul.f32 %v960, %v1035
        %v1037 = vrcp.pop %v1001
        %v1038 = vmul.f32 %v1001, %v1037
        %v1039 = vsub.f32 1.0, %v1038
        %v1040 = vmul.f32 %v1037, %v1039
        %v1041 = vadd.f32 %v1037, %v1040
        %vm1042 = vweird.f32 %v1001
        %vm1043 = vweird.f32 %v1037
        %vm1044 = vmor %vm1042, %vm1043
        %v1045 = vsel %vm1044, %v1037, %v1041
        %v1046 = vand.u32 2147483647, %v1001
        %vm1047 = vcmp.eq.f32.partialorder %v1046, 8.507059e+37
        %v1048 = vand.u32 %v1001, 2147483648
        %v1049 = vor.u32 1.1754944e-38, %v1048
        %v1050 = vsel %vm1047, %v1049, %v1045
        %v1051 = vmul.f32 %v961, %v1050
        %v1052 = vrcp.pop %v1002
        %v1053 = vmul.f32 %v1002, %v1052
        %v1054 = vsub.f32 1.0, %v1053
        %v1055 = vmul.f32 %v1052, %v1054
        %v1056 = vadd.f32 %v1052, %v1055
        %vm1057 = vweird.f32 %v1002
        %vm1058 = vweird.f32 %v1052
        %vm1059 = vmor %vm1057, %vm1058
        %v1060 = vsel %vm1059, %v1052, %v1056
        %v1061 = vand.u32 2147483647, %v1002
        %vm1062 = vcmp.eq.f32.partialorder %v1061, 8.507059e+37
        %v1063 = vand.u32 %v1002, 2147483648
        %v1064 = vor.u32 1.1754944e-38, %v1063
        %v1065 = vsel %vm1062, %v1064, %v1060
        %v1066 = vmul.f32 %v962, %v1065
        %v1067 = vrcp.pop %v1003
        %v1068 = vmul.f32 %v1003, %v1067
        %v1069 = vsub.f32 1.0, %v1068
        %v1070 = vmul.f32 %v1067, %v1069
        %v1071 = vadd.f32 %v1067, %v1070
        %vm1072 = vweird.f32 %v1003
        %vm1073 = vweird.f32 %v1067
        %vm1074 = vmor %vm1072, %vm1073
        %v1075 = vsel %vm1074, %v1067, %v1071
        %v1076 = vand.u32 2147483647, %v1003
        %vm1077 = vcmp.eq.f32.partialorder %v1076, 8.507059e+37
        %v1078 = vand.u32 %v1003, 2147483648
        %v1079 = vor.u32 1.1754944e-38, %v1078
        %v1080 = vsel %vm1077, %v1079, %v1075
        %v1081 = vmul.f32 %v963, %v1080
        %v1082 = vrcp.pop %v1004
        %v1083 = vmul.f32 %v1004, %v1082
        %v1084 = vsub.f32 1.0, %v1083
        %v1085 = vmul.f32 %v1082, %v1084
        %v1086 = vadd.f32 %v1082, %v1085
        %vm1087 = vweird.f32 %v1004
        %vm1088 = vweird.f32 %v1082
        %vm1089 = vmor %vm1087, %vm1088
        %v1090 = vsel %vm1089, %v1082, %v1086
        %v1091 = vand.u32 2147483647, %v1004
        %vm1092 = vcmp.eq.f32.partialorder %v1091, 8.507059e+37
        %v1093 = vand.u32 %v1004, 2147483648
        %v1094 = vor.u32 1.1754944e-38, %v1093
        %v1095 = vsel %vm1092, %v1094, %v1090
        %v1096 = vmul.f32 %v964, %v1095
        %v1097 = vrcp.pop %v1005
        %v1098 = vmul.f32 %v1005, %v1097
        %v1099 = vsub.f32 1.0, %v1098
        %v1100 = vmul.f32 %v1097, %v1099
        %v1101 = vadd.f32 %v1097, %v1100
        %vm1102 = vweird.f32 %v1005
        %vm1103 = vweird.f32 %v1097
        %vm1104 = vmor %vm1102, %vm1103
        %v1105 = vsel %vm1104, %v1097, %v1101
        %v1106 = vand.u32 2147483647, %v1005
        %vm1107 = vcmp.eq.f32.partialorder %v1106, 8.507059e+37
        %v1108 = vand.u32 %v1005, 2147483648
        %v1109 = vor.u32 1.1754944e-38, %v1108
        %v1110 = vsel %vm1107, %v1109, %v1105
        %v1111 = vmul.f32 %v965, %v1110
        %v1112 = vrcp.pop %v1006
        %v1113 = vmul.f32 %v1006, %v1112
        %v1114 = vsub.f32 1.0, %v1113
        %v1115 = vmul.f32 %v1112, %v1114
        %v1116 = vadd.f32 %v1112, %v1115
        %vm1117 = vweird.f32 %v1006
        %vm1118 = vweird.f32 %v1112
        %vm1119 = vmor %vm1117, %vm1118
        %v1120 = vsel %vm1119, %v1112, %v1116
        %v1121 = vand.u32 2147483647, %v1006
        %vm1122 = vcmp.eq.f32.partialorder %v1121, 8.507059e+37
        %v1123 = vand.u32 %v1006, 2147483648
        %v1124 = vor.u32 1.1754944e-38, %v1123
        %v1125 = vsel %vm1122, %v1124, %v1120
        %v1126 = vmul.f32 %v966, %v1125
        %v1127 = vsub.f32 1.0, %v1021
        %v1128 = vsub.f32 1.0, %v1036
        %v1129 = vsub.f32 1.0, %v1051
        %v1130 = vsub.f32 1.0, %v1066
        %v1131 = vsub.f32 1.0, %v1081
        %v1132 = vsub.f32 1.0, %v1096
        %v1133 = vsub.f32 1.0, %v1111
        %v1134 = vsub.f32 1.0, %v1126
        %v1135 = vmul.f32 %v1127, 0.5
        %v1136 = vmul.f32 %v1128, 0.5
        %v1137 = vmul.f32 %v1129, 0.5
        %v1138 = vmul.f32 %v1130, 0.5
        %v1139 = vmul.f32 %v1131, 0.5
        %v1140 = vmul.f32 %v1132, 0.5
        %v1141 = vmul.f32 %v1133, 0.5
        %v1142 = vmul.f32 %v1134, 0.5
        %v1143 = vmax.f32 %v1135, 0.0
        %v1144 = vmax.f32 %v1136, 0.0
        %v1145 = vmax.f32 %v1137, 0.0
        %v1146 = vmax.f32 %v1138, 0.0
        %v1147 = vmax.f32 %v1139, 0.0
        %v1148 = vmax.f32 %v1140, 0.0
        %v1149 = vmax.f32 %v1141, 0.0
        %v1150 = vmax.f32 %v1142, 0.0
        %v1151 = vmin.f32 %v1143, 1.0
        %v1152 = vmin.f32 %v1144, 1.0
        %v1153 = vmin.f32 %v1145, 1.0
        %v1154 = vmin.f32 %v1146, 1.0
        %v1155 = vmin.f32 %v1147, 1.0
        %v1156 = vmin.f32 %v1148, 1.0
        %v1157 = vmin.f32 %v1149, 1.0
        %v1158 = vmin.f32 %v1150, 1.0
        %v1159 = vsub.f32 %v332, %v340
        %v1160 = vsub.f32 %v333, %v341
        %v1161 = vsub.f32 %v334, %v342
        %v1162 = vsub.f32 %v335, %v343
        %v1163 = vsub.f32 %v336, %v344
        %v1164 = vsub.f32 %v337, %v345
        %v1165 = vsub.f32 %v338, %v346
        %v1166 = vsub.f32 %v339, %v347
        %v1167 = vand.u32 2147483647, %v1159
        %v1168 = vand.u32 2147483647, %v1160
        %v1169 = vand.u32 2147483647, %v1161
        %v1170 = vand.u32 2147483647, %v1162
        %v1171 = vand.u32 2147483647, %v1163
        %v1172 = vand.u32 2147483647, %v1164
        %v1173 = vand.u32 2147483647, %v1165
        %v1174 = vand.u32 2147483647, %v1166
        %v1175 = vmax.f32 %v1167, 0.0
        %v1176 = vmax.f32 %v1168, 0.0
        %v1177 = vmax.f32 %v1169, 0.0
        %v1178 = vmax.f32 %v1170, 0.0
        %v1179 = vmax.f32 %v1171, 0.0
        %v1180 = vmax.f32 %v1172, 0.0
        %v1181 = vmax.f32 %v1173, 0.0
        %v1182 = vmax.f32 %v1174, 0.0
        %v1183 = vmin.f32 %v1175, 1.0
        %v1184 = vmin.f32 %v1176, 1.0
        %v1185 = vmin.f32 %v1177, 1.0
        %v1186 = vmin.f32 %v1178, 1.0
        %v1187 = vmin.f32 %v1179, 1.0
        %v1188 = vmin.f32 %v1180, 1.0
        %v1189 = vmin.f32 %v1181, 1.0
        %v1190 = vmin.f32 %v1182, 1.0
        %v1191 = vmul.f32 %v1183, 0.15
        %v1192 = vmul.f32 %v1184, 0.15
        %v1193 = vmul.f32 %v1185, 0.15
        %v1194 = vmul.f32 %v1186, 0.15
        %v1195 = vmul.f32 %v1187, 0.15
        %v1196 = vmul.f32 %v1188, 0.15
        %v1197 = vmul.f32 %v1189, 0.15
        %v1198 = vmul.f32 %v1190, 0.15
        %v1199 = vmul.f32 %v1151, 0.85
        %v1200 = vmul.f32 %v1152, 0.85
        %v1201 = vmul.f32 %v1153, 0.85
        %v1202 = vmul.f32 %v1154, 0.85
        %v1203 = vmul.f32 %v1155, 0.85
        %v1204 = vmul.f32 %v1156, 0.85
        %v1205 = vmul.f32 %v1157, 0.85
        %v1206 = vmul.f32 %v1158, 0.85
        %v1207 = vadd.f32 %v1191, %v1199
        %v1208 = vadd.f32 %v1192, %v1200
        %v1209 = vadd.f32 %v1193, %v1201
        %v1210 = vadd.f32 %v1194, %v1202
        %v1211 = vadd.f32 %v1195, %v1203
        %v1212 = vadd.f32 %v1196, %v1204
        %v1213 = vadd.f32 %v1197, %v1205
        %v1214 = vadd.f32 %v1198, %v1206
        %1215 = vst [vmem:[%s320] sm:$0xff] %v1151
        %1216 = vst [vmem:[%s320 + $0x8] sm:$0xff] %v1152
        %1217 = vst [vmem:[%s320 + $0x10] sm:$0xff] %v1153
        %1218 = vst [vmem:[%s320 + $0x18] sm:$0xff] %v1154
        %1219 = vst [vmem:[%s320 + $0x20] sm:$0xff] %v1155
        %1220 = vst [vmem:[%s320 + $0x28] sm:$0xff] %v1156
        %1221 = vst [vmem:[%s320 + $0x30] sm:$0xff] %v1157
        %1222 = vst [vmem:[%s320 + $0x38] sm:$0xff] %v1158
        %1223 = vst [vmem:[%s327] sm:$0xff] %v1207
        %1224 = vst [vmem:[%s327 + $0x8] sm:$0xff] %v1208
        %1225 = vst [vmem:[%s327 + $0x10] sm:$0xff] %v1209
        %1226 = vst [vmem:[%s327 + $0x18] sm:$0xff] %v1210
        %1227 = vst [vmem:[%s327 + $0x20] sm:$0xff] %v1211
        %1228 = vst [vmem:[%s327 + $0x28] sm:$0xff] %v1212
        %1229 = vst [vmem:[%s327 + $0x30] sm:$0xff] %v1213
        %1230 = vst [vmem:[%s327 + $0x38] sm:$0xff] %v1214
        %s1231 = sand.u32 %s127, 1
        %s1232 = scalar_lea.sflag [#allocation4], %s1231
        %s1233 = sand.u32 %s127, 1
        %s1234 = smul.addr %s1233, 64
        %s1235 = scalar_lea.vmem [#allocation9], %s1234
        %s1236 = sand.u32 %s153, 1
        %s1237 = scalar_lea.sflag [#allocation11], %s1236
        %s1238 = sand.u32 %s153, 1
        %s1239 = smul.addr %s1238, 64
        %s1240 = scalar_lea.vmem [#allocation10], %s1239
        // Predicated region
        $region53: #{ssim_and_photometric.1} parent=35 // pred_check
          %p1241 = pneg %p137
        $region54: #{ssim_and_photometric.1} parent=35 // pred_check_branch
          %1243 = sbr.rel (%p1241) target = $region56
        $region55: #{ssim_and_photometric.1} parent=35 // pred_region
          %s1244 = smul.u32 4, %s25
          %1246 = vsyncadd %s1232, 0
          %s1247 = smul.addr %s1244, 2
          %s1248 = smul.addr %s1247, 8
          %s1249 = scalar_lea.hbm %s4, %s1248
          %s1250 = sshll.u32 %s1235, 4
          %s1251 = int_to_ptr.vmem [resolvable:$true] %s1250
          %s1252 = sshll.u32 %s1249, 4
          %s1253 = int_to_ptr.hbm [resolvable:$true] %s1252
          %1258 = dma.vmem_to_hbm [thread:$0]  %s1251, 1024, %s1253, %s1232, 128, 128, 8
        $region56: #{ssim_and_photometric.1} parent=35 // pred_fallthru
          _
        // Predicated region
        $region57: #{ssim_and_photometric.1} parent=35 // pred_check
          %p1259 = pneg %p163
        $region58: #{ssim_and_photometric.1} parent=35 // pred_check_branch
          %1261 = sbr.rel (%p1259) target = $region60
        $region59: #{ssim_and_photometric.1} parent=35 // pred_region
          %s1262 = smul.u32 4, %s25
          %1264 = vsyncadd %s1237, 0
          %s1265 = smul.addr %s1262, 2
          %s1266 = smul.addr %s1265, 8
          %s1267 = scalar_lea.hbm %s5, %s1266
          %s1268 = sshll.u32 %s1240, 4
          %s1269 = int_to_ptr.vmem [resolvable:$true] %s1268
          %s1270 = sshll.u32 %s1267, 4
          %s1271 = int_to_ptr.hbm [resolvable:$true] %s1270
          %1276 = dma.vmem_to_hbm [thread:$0]  %s1269, 1024, %s1271, %s1237, 128, 128, 8
        $region60: #{ssim_and_photometric.1} parent=35 // pred_fallthru
          _
      $region36: #{ssim_and_photometric.1} parent=5 // pred_fallthru
        _
      %p1277 = scmp.le.s32.totalorder 2, %s20
      // Predicated region
      $region61: #{ssim_and_photometric.1} parent=5 // pred_check
        %p1278 = pneg %p1277
      $region62: #{ssim_and_photometric.1} parent=5 // pred_check_branch
        %1280 = sbr.rel (%p1278) target = $region64
      $region63: #{ssim_and_photometric.1} parent=5 // pred_region
        %s1281 = ssub.s32 %s20, 2
        // Predicated region
        $region65: #{ssim_and_photometric.1} parent=63 // pred_check
          %p1282 = pneg %p143
        $region66: #{ssim_and_photometric.1} parent=63 // pred_check_branch
          %1284 = sbr.rel (%p1282) target = $region68
        $region67: #{ssim_and_photometric.1} parent=63 // pred_region
          %s1285 = sand.u32 %s128, 1
          %s1286 = scalar_lea.sflag [#allocation4], %s1285
          %s1287 = sand.u32 %s128, 1
          %s1288 = smul.addr %s1287, 64
          %s1289 = scalar_lea.vmem [#allocation9], %s1288
          %1291 = dma.done %s1286, 1024
        $region68: #{ssim_and_photometric.1} parent=63 // pred_fallthru
          _
        // Predicated region
        $region69: #{ssim_and_photometric.1} parent=63 // pred_check
          %p1292 = pneg %p169
        $region70: #{ssim_and_photometric.1} parent=63 // pred_check_branch
          %1294 = sbr.rel (%p1292) target = $region72
        $region71: #{ssim_and_photometric.1} parent=63 // pred_region
          %s1295 = sand.u32 %s154, 1
          %s1296 = scalar_lea.sflag [#allocation11], %s1295
          %s1297 = sand.u32 %s154, 1
          %s1298 = smul.addr %s1297, 64
          %s1299 = scalar_lea.vmem [#allocation10], %s1298
          %1301 = dma.done %s1296, 1024
        $region72: #{ssim_and_photometric.1} parent=63 // pred_fallthru
          _
      $region64: #{ssim_and_photometric.1} parent=5 // pred_fallthru
        _
    $region6: #{ssim_and_photometric.1} parent=1 // loop_footer
      %s24 = sadd.s32 1, %s20
    $region7: #{ssim_and_photometric.1} parent=1 // loop_footer_branch
      %19 = sbr.rel target = $region3
    $region8: #{ssim_and_photometric.1} parent=1 // loop_exit
      _
    %1302 = vsyncpa [#allocation3], 1
    %s1303 = scalar_lea.sflag [#allocation3], 1
    %1304 = vsyncpa %s1303, 1
    %1305 = vsyncpa [#allocation6], 1
    %1306 = vsyncpa [#allocation4], 1
    %s1307 = scalar_lea.sflag [#allocation4], 1
    %1308 = vsyncpa %s1307, 1
    %1309 = vsyncpa [#allocation11], 1
    %s1310 = scalar_lea.sflag [#allocation11], 1
    %1311 = vsyncpa %s1310, 1

</llo_original>
